<compile_context>
chip_gen: v6e
topology: v6e:2x2x1
jax: 0.10.0
libtpu: 0.0.40
codegen_flags: <defaults>
</compile_context>

<pallas_src>
import functools

import jax
import jax.numpy as jnp
from jax.experimental import pallas as pl
from jax.experimental.pallas import tpu as pltpu

LANE = 128                  # lanes per row of the batch layout
HIDDEN = 32                 # fc1 output features
ROW_UNIT = 16               # row granularity: valid tiling for f32 and bf16 blocks
DEFAULT_BLOCK_ROWS = 2048   # max rows (of 128 lanes) per grid step


def _zpredictor_kernel(xn_ref, xd_ref, w1_ref, b1_ref, w2_ref, b2_ref, out_ref):
    """One (block_rows, 128) tile of batch elements, fully on the VPU/EUP.

    xn_ref, xd_ref : VMEM (block_rows, 128), f32 or bf16 (compute dtype)
    out_ref        : VMEM (block_rows, 128) f32
    w1_ref : SMEM (2, HIDDEN) f32   -- (in_features, out_features)
    b1_ref : SMEM (HIDDEN,)   f32
    w2_ref : SMEM (HIDDEN,)   f32
    b2_ref : SMEM (1,)        f32
    """
    cdt = xn_ref.dtype                 # compute dtype == streamed tile dtype
    xn = xn_ref[...]
    xd = xd_ref[...]
    hidden = w1_ref.shape[1]

    def hidden_term(j):
        w_n = w1_ref[0, j].astype(cdt)
        w_d = w1_ref[1, j].astype(cdt)
        b_j = b1_ref[j].astype(cdt)
        w2_j = w2_ref[j].astype(cdt)
        return jnp.maximum(xn * w_n + xd * w_d + b_j, 0.0) * w2_j

    # b2 folded into the accumulator init; the first hidden term seeds acc
    # (no jnp.zeros_like + no separate bias add -> a few VALU ops saved).
    acc = hidden_term(0) + b2_ref[0].astype(cdt)
    for j in range(1, hidden):
        acc = acc + hidden_term(j)

    # Upcast only for the sigmoid/store; EUP handles the exp, store is f32.
    out_ref[...] = jax.nn.sigmoid(acc.astype(jnp.float32)).astype(out_ref.dtype)


@functools.partial(jax.jit, static_argnames=("block_rows", "compute_dtype"))
def zpredictor_forward(x_n, x_delta, w1, b1, w2, b2, *,
                       block_rows=DEFAULT_BLOCK_ROWS,
                       compute_dtype=jnp.float32):
    """x_n, x_delta: (B, 1) -> (B, 1) sigmoid output.

    Weights: w1 (2, 32) [in, out], b1 (32,), w2 (32,), b2 (1,).
    compute_dtype=jnp.bfloat16 enables the fast bf16 compute/IO path
    (relaxes accuracy to ~1e-3 on the sigmoid score).
    """
    B = x_n.shape[0]
    xn = x_n.reshape(-1).astype(compute_dtype)
    xd = x_delta.reshape(-1).astype(compute_dtype)

    # --- grid shaping -------------------------------------------------------
    rows = max(pl.cdiv(B, LANE), 1)            # 128-lane rows needed
    units = pl.cdiv(rows, ROW_UNIT)            # ROW_UNIT-row groups needed
    max_units_per_block = max(block_rows // ROW_UNIT, 1)

    steps = pl.cdiv(units, max_units_per_block)
    # Guarantee >= 2 (even) grid steps whenever there is enough work so the
    # "parallel" batch axis can shard across both TensorCores on v7x.
    if units >= 2:
        steps = max(steps, 2)
        if steps % 2:
            steps += 1

    block_units = pl.cdiv(units, steps)        # block_rows shrinks to fit, no
    block_rows_eff = block_units * ROW_UNIT    # padding up to a huge block.
    rows_pad = block_units * steps * ROW_UNIT
    b_pad = rows_pad * LANE

    # --- pad / reshape (skipped entirely when B is already tile-aligned) ----
    if b_pad == B:
        xn_p = xn.reshape(rows_pad, LANE)
        xd_p = xd.reshape(rows_pad, LANE)
    else:
        pad = (0, b_pad - B)
        xn_p = jnp.pad(xn, pad).reshape(rows_pad, LANE)
        xd_p = jnp.pad(xd, pad).reshape(rows_pad, LANE)

    tile_spec = pl.BlockSpec((block_rows_eff, LANE), lambda i: (i, 0))
    smem_spec = pl.BlockSpec(memory_space=pltpu.MemorySpace.SMEM)

    out = pl.pallas_call(
        _zpredictor_kernel,
        out_shape=jax.ShapeDtypeStruct((rows_pad, LANE), jnp.float32),
        grid=(steps,),
        in_specs=[
            tile_spec,   # x_n tile (VMEM, pipelined)
            tile_spec,   # x_delta tile
            smem_spec,   # w1 (2, 32)  resident scalars
            smem_spec,   # b1 (32,)
            smem_spec,   # w2 (32,)
            smem_spec,   # b2 (1,)
        ],
        out_specs=tile_spec,
        compiler_params=pltpu.CompilerParams(
            dimension_semantics=("parallel",),      # megacore on v7x
            vmem_limit_bytes=32 * 1024 * 1024,      # safe on v5e/v6e/v7x
        ),
    )(xn_p, xd_p,
      w1.astype(jnp.float32), b1.astype(jnp.float32),
      w2.astype(jnp.float32), b2.astype(jnp.float32))

    if b_pad == B:          # no slice copy when nothing was padded
        return out.reshape(B, 1)
    return out.reshape(b_pad)[:B].reshape(B, 1)


def init_params(key):
    """Deterministic init mimicking torch.nn.Linear default (uniform +-1/sqrt(fan_in))."""
    k1, k2, k3, k4 = jax.random.split(key, 4)
    in1, out1 = 2, HIDDEN
    in2 = HIDDEN
    bound1 = 1.0 / jnp.sqrt(in1)
    bound2 = 1.0 / jnp.sqrt(in2)
    # Stored as (in_features, out_features) so w1[0, j] is the x_n weight of hidden j.
    w1 = jax.random.uniform(k1, (in1, out1), jnp.float32, -bound1, bound1)
    b1 = jax.random.uniform(k2, (out1,), jnp.float32, -bound1, bound1)
    w2 = jax.random.uniform(k3, (in2,), jnp.float32, -bound2, bound2)
    b2 = jax.random.uniform(k4, (1,), jnp.float32, -bound2, bound2)
    return w1, b1, w2, b2


def reference_forward(x_n, x_delta, w1, b1, w2, b2):
    x = jnp.concatenate([x_n, x_delta], axis=-1)              # (B, 2)
    h = jnp.maximum(x @ w1 + b1[None, :], 0.0)                # (B, 32)
    z = h @ w2[:, None] + b2[None, :]                         # (B, 1)
    return jax.nn.sigmoid(z)


if __name__ == "__main__":
    key = jax.random.PRNGKey(0)
    kx, kd, kp = jax.random.split(key, 3)
    w1, b1, w2, b2 = init_params(kp)

    # Small batch (single tile) — exact f32 path.
    B = 8
    x_n = jax.random.normal(kx, (B, 1), jnp.float32)
    x_delta = jax.random.normal(kd, (B, 1), jnp.float32)
    out = jax.block_until_ready(zpredictor_forward(x_n, x_delta, w1, b1, w2, b2))
    ref = reference_forward(x_n, x_delta, w1, b1, w2, b2)
    assert out.shape == (B, 1)
    assert jnp.allclose(out, ref, atol=1e-5, rtol=1e-5), (out, ref)

    # Ragged batch: exercises the multi-step (TensorCore-parallel) grid and
    # the tail-padding / slice path.
    B2 = 4103
    x_n2 = jax.random.normal(kx, (B2, 1), jnp.float32)
    x_delta2 = jax.random.normal(kd, (B2, 1), jnp.float32)
    out2 = jax.block_until_ready(zpredictor_forward(x_n2, x_delta2, w1, b1, w2, b2))
    ref2 = reference_forward(x_n2, x_delta2, w1, b1, w2, b2)
    assert out2.shape == (B2, 1)
    assert jnp.allclose(out2, ref2, atol=1e-5, rtol=1e-5)

    # Optional fast path: bf16 compute/IO (v6e/v7x ~2x), looser tolerance.
    out_bf16 = jax.block_until_ready(
        zpredictor_forward(x_n2, x_delta2, w1, b1, w2, b2,
                           compute_dtype=jnp.bfloat16))
    assert jnp.allclose(out_bf16, ref2, atol=5e-2)

    print("KERNEL_OK")
</pallas_src>

<mosaic_0001>
module attributes {stable_mosaic.version = 11 : i64} {
  func.func @_zpredictor_kernel(%arg0: i32, %arg1: memref<16x128xf32, #tpu.memory_space<vmem>>, %arg2: memref<16x128xf32, #tpu.memory_space<vmem>>, %arg3: memref<2x32xf32, #tpu.memory_space<smem>>, %arg4: memref<32xf32, #tpu.memory_space<smem>>, %arg5: memref<32xf32, #tpu.memory_space<smem>>, %arg6: memref<1xf32, #tpu.memory_space<smem>>, %arg7: memref<16x128xf32, #tpu.memory_space<vmem>>) attributes {dimension_semantics = [#tpu.dimension_semantics<parallel>], iteration_bounds = array<i64: 1>, scalar_prefetch = 0 : i64, scratch_operands = 0 : i64, tpu.core_type = #tpu.core_type<tc>, window_params = [{transform_indices = @transform_0, window_bounds = array<i64: 16, 128>}, {transform_indices = @transform_1, window_bounds = array<i64: 16, 128>}, {transform_indices = @transform_2, window_bounds = array<i64: 2, 32>}, {transform_indices = @transform_3, window_bounds = array<i64: 32>}, {transform_indices = @transform_4, window_bounds = array<i64: 32>}, {transform_indices = @transform_5, window_bounds = array<i64: 1>}, {transform_indices = @transform_6, window_bounds = array<i64: 16, 128>}]} {
    %c0 = arith.constant 0 : index
    %c0_0 = arith.constant 0 : index
    %0 = vector.load %arg1[%c0, %c0_0] : memref<16x128xf32, #tpu.memory_space<vmem>>, vector<16x128xf32>
    %c0_1 = arith.constant 0 : index
    %c0_2 = arith.constant 0 : index
    %1 = vector.load %arg2[%c0_1, %c0_2] : memref<16x128xf32, #tpu.memory_space<vmem>>, vector<16x128xf32>
    %c0_3 = arith.constant 0 : index
    %c0_4 = arith.constant 0 : index
    %2 = memref.load %arg3[%c0_3, %c0_4] : memref<2x32xf32, #tpu.memory_space<smem>>
    %c1 = arith.constant 1 : index
    %c0_5 = arith.constant 0 : index
    %3 = memref.load %arg3[%c1, %c0_5] : memref<2x32xf32, #tpu.memory_space<smem>>
    %c0_6 = arith.constant 0 : index
    %4 = memref.load %arg4[%c0_6] : memref<32xf32, #tpu.memory_space<smem>>
    %c0_7 = arith.constant 0 : index
    %5 = memref.load %arg5[%c0_7] : memref<32xf32, #tpu.memory_space<smem>>
    %6 = vector.broadcast %2 : f32 to vector<16x128xf32>
    %7 = arith.mulf %0, %6 : vector<16x128xf32>
    %8 = vector.broadcast %3 : f32 to vector<16x128xf32>
    %9 = arith.mulf %1, %8 : vector<16x128xf32>
    %10 = arith.addf %7, %9 : vector<16x128xf32>
    %11 = vector.broadcast %4 : f32 to vector<16x128xf32>
    %12 = arith.addf %10, %11 : vector<16x128xf32>
    %cst = arith.constant 0.000000e+00 : f32
    %13 = vector.broadcast %cst : f32 to vector<16x128xf32>
    %14 = arith.maximumf %12, %13 : vector<16x128xf32>
    %15 = vector.broadcast %5 : f32 to vector<16x128xf32>
    %16 = arith.mulf %14, %15 : vector<16x128xf32>
    %c0_8 = arith.constant 0 : index
    %17 = memref.load %arg6[%c0_8] : memref<1xf32, #tpu.memory_space<smem>>
    %18 = vector.broadcast %17 : f32 to vector<16x128xf32>
    %19 = arith.addf %16, %18 : vector<16x128xf32>
    %c0_9 = arith.constant 0 : index
    %c1_10 = arith.constant 1 : index
    %20 = memref.load %arg3[%c0_9, %c1_10] : memref<2x32xf32, #tpu.memory_space<smem>>
    %c1_11 = arith.constant 1 : index
    %c1_12 = arith.constant 1 : index
    %21 = memref.load %arg3[%c1_11, %c1_12] : memref<2x32xf32, #tpu.memory_space<smem>>
    %c1_13 = arith.constant 1 : index
    %22 = memref.load %arg4[%c1_13] : memref<32xf32, #tpu.memory_space<smem>>
    %c1_14 = arith.constant 1 : index
    %23 = memref.load %arg5[%c1_14] : memref<32xf32, #tpu.memory_space<smem>>
    %24 = vector.broadcast %20 : f32 to vector<16x128xf32>
    %25 = arith.mulf %0, %24 : vector<16x128xf32>
    %26 = vector.broadcast %21 : f32 to vector<16x128xf32>
    %27 = arith.mulf %1, %26 : vector<16x128xf32>
    %28 = arith.addf %25, %27 : vector<16x128xf32>
    %29 = vector.broadcast %22 : f32 to vector<16x128xf32>
    %30 = arith.addf %28, %29 : vector<16x128xf32>
    %cst_15 = arith.constant 0.000000e+00 : f32
    %31 = vector.broadcast %cst_15 : f32 to vector<16x128xf32>
    %32 = arith.maximumf %30, %31 : vector<16x128xf32>
    %33 = vector.broadcast %23 : f32 to vector<16x128xf32>
    %34 = arith.mulf %32, %33 : vector<16x128xf32>
    %35 = arith.addf %19, %34 : vector<16x128xf32>
    %c0_16 = arith.constant 0 : index
    %c2 = arith.constant 2 : index
    %36 = memref.load %arg3[%c0_16, %c2] : memref<2x32xf32, #tpu.memory_space<smem>>
    %c1_17 = arith.constant 1 : index
    %c2_18 = arith.constant 2 : index
    %37 = memref.load %arg3[%c1_17, %c2_18] : memref<2x32xf32, #tpu.memory_space<smem>>
    %c2_19 = arith.constant 2 : index
    %38 = memref.load %arg4[%c2_19] : memref<32xf32, #tpu.memory_space<smem>>
    %c2_20 = arith.constant 2 : index
    %39 = memref.load %arg5[%c2_20] : memref<32xf32, #tpu.memory_space<smem>>
    %40 = vector.broadcast %36 : f32 to vector<16x128xf32>
    %41 = arith.mulf %0, %40 : vector<16x128xf32>
    %42 = vector.broadcast %37 : f32 to vector<16x128xf32>
    %43 = arith.mulf %1, %42 : vector<16x128xf32>
    %44 = arith.addf %41, %43 : vector<16x128xf32>
    %45 = vector.broadcast %38 : f32 to vector<16x128xf32>
    %46 = arith.addf %44, %45 : vector<16x128xf32>
    %cst_21 = arith.constant 0.000000e+00 : f32
    %47 = vector.broadcast %cst_21 : f32 to vector<16x128xf32>
    %48 = arith.maximumf %46, %47 : vector<16x128xf32>
    %49 = vector.broadcast %39 : f32 to vector<16x128xf32>
    %50 = arith.mulf %48, %49 : vector<16x128xf32>
    %51 = arith.addf %35, %50 : vector<16x128xf32>
    %c0_22 = arith.constant 0 : index
    %c3 = arith.constant 3 : index
    %52 = memref.load %arg3[%c0_22, %c3] : memref<2x32xf32, #tpu.memory_space<smem>>
    %c1_23 = arith.constant 1 : index
    %c3_24 = arith.constant 3 : index
    %53 = memref.load %arg3[%c1_23, %c3_24] : memref<2x32xf32, #tpu.memory_space<smem>>
    %c3_25 = arith.constant 3 : index
    %54 = memref.load %arg4[%c3_25] : memref<32xf32, #tpu.memory_space<smem>>
    %c3_26 = arith.constant 3 : index
    %55 = memref.load %arg5[%c3_26] : memref<32xf32, #tpu.memory_space<smem>>
    %56 = vector.broadcast %52 : f32 to vector<16x128xf32>
    %57 = arith.mulf %0, %56 : vector<16x128xf32>
    %58 = vector.broadcast %53 : f32 to vector<16x128xf32>
    %59 = arith.mulf %1, %58 : vector<16x128xf32>
    %60 = arith.addf %57, %59 : vector<16x128xf32>
    %61 = vector.broadcast %54 : f32 to vector<16x128xf32>
    %62 = arith.addf %60, %61 : vector<16x128xf32>
    %cst_27 = arith.constant 0.000000e+00 : f32
    %63 = vector.broadcast %cst_27 : f32 to vector<16x128xf32>
    %64 = arith.maximumf %62, %63 : vector<16x128xf32>
    %65 = vector.broadcast %55 : f32 to vector<16x128xf32>
    %66 = arith.mulf %64, %65 : vector<16x128xf32>
    %67 = arith.addf %51, %66 : vector<16x128xf32>
    %c0_28 = arith.constant 0 : index
    %c4 = arith.constant 4 : index
    %68 = memref.load %arg3[%c0_28, %c4] : memref<2x32xf32, #tpu.memory_space<smem>>
    %c1_29 = arith.constant 1 : index
    %c4_30 = arith.constant 4 : index
    %69 = memref.load %arg3[%c1_29, %c4_30] : memref<2x32xf32, #tpu.memory_space<smem>>
    %c4_31 = arith.constant 4 : index
    %70 = memref.load %arg4[%c4_31] : memref<32xf32, #tpu.memory_space<smem>>
    %c4_32 = arith.constant 4 : index
    %71 = memref.load %arg5[%c4_32] : memref<32xf32, #tpu.memory_space<smem>>
    %72 = vector.broadcast %68 : f32 to vector<16x128xf32>
    %73 = arith.mulf %0, %72 : vector<16x128xf32>
    %74 = vector.broadcast %69 : f32 to vector<16x128xf32>
    %75 = arith.mulf %1, %74 : vector<16x128xf32>
    %76 = arith.addf %73, %75 : vector<16x128xf32>
    %77 = vector.broadcast %70 : f32 to vector<16x128xf32>
    %78 = arith.addf %76, %77 : vector<16x128xf32>
    %cst_33 = arith.constant 0.000000e+00 : f32
    %79 = vector.broadcast %cst_33 : f32 to vector<16x128xf32>
    %80 = arith.maximumf %78, %79 : vector<16x128xf32>
    %81 = vector.broadcast %71 : f32 to vector<16x128xf32>
    %82 = arith.mulf %80, %81 : vector<16x128xf32>
    %83 = arith.addf %67, %82 : vector<16x128xf32>
    %c0_34 = arith.constant 0 : index
    %c5 = arith.constant 5 : index
    %84 = memref.load %arg3[%c0_34, %c5] : memref<2x32xf32, #tpu.memory_space<smem>>
    %c1_35 = arith.constant 1 : index
    %c5_36 = arith.constant 5 : index
    %85 = memref.load %arg3[%c1_35, %c5_36] : memref<2x32xf32, #tpu.memory_space<smem>>
    %c5_37 = arith.constant 5 : index
    %86 = memref.load %arg4[%c5_37] : memref<32xf32, #tpu.memory_space<smem>>
    %c5_38 = arith.constant 5 : index
    %87 = memref.load %arg5[%c5_38] : memref<32xf32, #tpu.memory_space<smem>>
    %88 = vector.broadcast %84 : f32 to vector<16x128xf32>
    %89 = arith.mulf %0, %88 : vector<16x128xf32>
    %90 = vector.broadcast %85 : f32 to vector<16x128xf32>
    %91 = arith.mulf %1, %90 : vector<16x128xf32>
    %92 = arith.addf %89, %91 : vector<16x128xf32>
    %93 = vector.broadcast %86 : f32 to vector<16x128xf32>
    %94 = arith.addf %92, %93 : vector<16x128xf32>
    %cst_39 = arith.constant 0.000000e+00 : f32
    %95 = vector.broadcast %cst_39 : f32 to vector<16x128xf32>
    %96 = arith.maximumf %94, %95 : vector<16x128xf32>
    %97 = vector.broadcast %87 : f32 to vector<16x128xf32>
    %98 = arith.mulf %96, %97 : vector<16x128xf32>
    %99 = arith.addf %83, %98 : vector<16x128xf32>
    %c0_40 = arith.constant 0 : index
    %c6 = arith.constant 6 : index
    %100 = memref.load %arg3[%c0_40, %c6] : memref<2x32xf32, #tpu.memory_space<smem>>
    %c1_41 = arith.constant 1 : index
    %c6_42 = arith.constant 6 : index
    %101 = memref.load %arg3[%c1_41, %c6_42] : memref<2x32xf32, #tpu.memory_space<smem>>
    %c6_43 = arith.constant 6 : index
    %102 = memref.load %arg4[%c6_43] : memref<32xf32, #tpu.memory_space<smem>>
    %c6_44 = arith.constant 6 : index
    %103 = memref.load %arg5[%c6_44] : memref<32xf32, #tpu.memory_space<smem>>
    %104 = vector.broadcast %100 : f32 to vector<16x128xf32>
    %105 = arith.mulf %0, %104 : vector<16x128xf32>
    %106 = vector.broadcast %101 : f32 to vector<16x128xf32>
    %107 = arith.mulf %1, %106 : vector<16x128xf32>
    %108 = arith.addf %105, %107 : vector<16x128xf32>
    %109 = vector.broadcast %102 : f32 to vector<16x128xf32>
    %110 = arith.addf %108, %109 : vector<16x128xf32>
    %cst_45 = arith.constant 0.000000e+00 : f32
    %111 = vector.broadcast %cst_45 : f32 to vector<16x128xf32>
    %112 = arith.maximumf %110, %111 : vector<16x128xf32>
    %113 = vector.broadcast %103 : f32 to vector<16x128xf32>
    %114 = arith.mulf %112, %113 : vector<16x128xf32>
    %115 = arith.addf %99, %114 : vector<16x128xf32>
    %c0_46 = arith.constant 0 : index
    %c7 = arith.constant 7 : index
    %116 = memref.load %arg3[%c0_46, %c7] : memref<2x32xf32, #tpu.memory_space<smem>>
    %c1_47 = arith.constant 1 : index
    %c7_48 = arith.constant 7 : index
    %117 = memref.load %arg3[%c1_47, %c7_48] : memref<2x32xf32, #tpu.memory_space<smem>>
    %c7_49 = arith.constant 7 : index
    %118 = memref.load %arg4[%c7_49] : memref<32xf32, #tpu.memory_space<smem>>
    %c7_50 = arith.constant 7 : index
    %119 = memref.load %arg5[%c7_50] : memref<32xf32, #tpu.memory_space<smem>>
    %120 = vector.broadcast %116 : f32 to vector<16x128xf32>
    %121 = arith.mulf %0, %120 : vector<16x128xf32>
    %122 = vector.broadcast %117 : f32 to vector<16x128xf32>
    %123 = arith.mulf %1, %122 : vector<16x128xf32>
    %124 = arith.addf %121, %123 : vector<16x128xf32>
    %125 = vector.broadcast %118 : f32 to vector<16x128xf32>
    %126 = arith.addf %124, %125 : vector<16x128xf32>
    %cst_51 = arith.constant 0.000000e+00 : f32
    %127 = vector.broadcast %cst_51 : f32 to vector<16x128xf32>
    %128 = arith.maximumf %126, %127 : vector<16x128xf32>
    %129 = vector.broadcast %119 : f32 to vector<16x128xf32>
    %130 = arith.mulf %128, %129 : vector<16x128xf32>
    %131 = arith.addf %115, %130 : vector<16x128xf32>
    %c0_52 = arith.constant 0 : index
    %c8 = arith.constant 8 : index
    %132 = memref.load %arg3[%c0_52, %c8] : memref<2x32xf32, #tpu.memory_space<smem>>
    %c1_53 = arith.constant 1 : index
    %c8_54 = arith.constant 8 : index
    %133 = memref.load %arg3[%c1_53, %c8_54] : memref<2x32xf32, #tpu.memory_space<smem>>
    %c8_55 = arith.constant 8 : index
    %134 = memref.load %arg4[%c8_55] : memref<32xf32, #tpu.memory_space<smem>>
    %c8_56 = arith.constant 8 : index
    %135 = memref.load %arg5[%c8_56] : memref<32xf32, #tpu.memory_space<smem>>
    %136 = vector.broadcast %132 : f32 to vector<16x128xf32>
    %137 = arith.mulf %0, %136 : vector<16x128xf32>
    %138 = vector.broadcast %133 : f32 to vector<16x128xf32>
    %139 = arith.mulf %1, %138 : vector<16x128xf32>
    %140 = arith.addf %137, %139 : vector<16x128xf32>
    %141 = vector.broadcast %134 : f32 to vector<16x128xf32>
    %142 = arith.addf %140, %141 : vector<16x128xf32>
    %cst_57 = arith.constant 0.000000e+00 : f32
    %143 = vector.broadcast %cst_57 : f32 to vector<16x128xf32>
    %144 = arith.maximumf %142, %143 : vector<16x128xf32>
    %145 = vector.broadcast %135 : f32 to vector<16x128xf32>
    %146 = arith.mulf %144, %145 : vector<16x128xf32>
    %147 = arith.addf %131, %146 : vector<16x128xf32>
    %c0_58 = arith.constant 0 : index
    %c9 = arith.constant 9 : index
    %148 = memref.load %arg3[%c0_58, %c9] : memref<2x32xf32, #tpu.memory_space<smem>>
    %c1_59 = arith.constant 1 : index
    %c9_60 = arith.constant 9 : index
    %149 = memref.load %arg3[%c1_59, %c9_60] : memref<2x32xf32, #tpu.memory_space<smem>>
    %c9_61 = arith.constant 9 : index
    %150 = memref.load %arg4[%c9_61] : memref<32xf32, #tpu.memory_space<smem>>
    %c9_62 = arith.constant 9 : index
    %151 = memref.load %arg5[%c9_62] : memref<32xf32, #tpu.memory_space<smem>>
    %152 = vector.broadcast %148 : f32 to vector<16x128xf32>
    %153 = arith.mulf %0, %152 : vector<16x128xf32>
    %154 = vector.broadcast %149 : f32 to vector<16x128xf32>
    %155 = arith.mulf %1, %154 : vector<16x128xf32>
    %156 = arith.addf %153, %155 : vector<16x128xf32>
    %157 = vector.broadcast %150 : f32 to vector<16x128xf32>
    %158 = arith.addf %156, %157 : vector<16x128xf32>
    %cst_63 = arith.constant 0.000000e+00 : f32
    %159 = vector.broadcast %cst_63 : f32 to vector<16x128xf32>
    %160 = arith.maximumf %158, %159 : vector<16x128xf32>
    %161 = vector.broadcast %151 : f32 to vector<16x128xf32>
    %162 = arith.mulf %160, %161 : vector<16x128xf32>
    %163 = arith.addf %147, %162 : vector<16x128xf32>
    %c0_64 = arith.constant 0 : index
    %c10 = arith.constant 10 : index
    %164 = memref.load %arg3[%c0_64, %c10] : memref<2x32xf32, #tpu.memory_space<smem>>
    %c1_65 = arith.constant 1 : index
    %c10_66 = arith.constant 10 : index
    %165 = memref.load %arg3[%c1_65, %c10_66] : memref<2x32xf32, #tpu.memory_space<smem>>
    %c10_67 = arith.constant 10 : index
    %166 = memref.load %arg4[%c10_67] : memref<32xf32, #tpu.memory_space<smem>>
    %c10_68 = arith.constant 10 : index
    %167 = memref.load %arg5[%c10_68] : memref<32xf32, #tpu.memory_space<smem>>
    %168 = vector.broadcast %164 : f32 to vector<16x128xf32>
    %169 = arith.mulf %0, %168 : vector<16x128xf32>
    %170 = vector.broadcast %165 : f32 to vector<16x128xf32>
    %171 = arith.mulf %1, %170 : vector<16x128xf32>
    %172 = arith.addf %169, %171 : vector<16x128xf32>
    %173 = vector.broadcast %166 : f32 to vector<16x128xf32>
    %174 = arith.addf %172, %173 : vector<16x128xf32>
    %cst_69 = arith.constant 0.000000e+00 : f32
    %175 = vector.broadcast %cst_69 : f32 to vector<16x128xf32>
    %176 = arith.maximumf %174, %175 : vector<16x128xf32>
    %177 = vector.broadcast %167 : f32 to vector<16x128xf32>
    %178 = arith.mulf %176, %177 : vector<16x128xf32>
    %179 = arith.addf %163, %178 : vector<16x128xf32>
    %c0_70 = arith.constant 0 : index
    %c11 = arith.constant 11 : index
    %180 = memref.load %arg3[%c0_70, %c11] : memref<2x32xf32, #tpu.memory_space<smem>>
    %c1_71 = arith.constant 1 : index
    %c11_72 = arith.constant 11 : index
    %181 = memref.load %arg3[%c1_71, %c11_72] : memref<2x32xf32, #tpu.memory_space<smem>>
    %c11_73 = arith.constant 11 : index
    %182 = memref.load %arg4[%c11_73] : memref<32xf32, #tpu.memory_space<smem>>
    %c11_74 = arith.constant 11 : index
    %183 = memref.load %arg5[%c11_74] : memref<32xf32, #tpu.memory_space<smem>>
    %184 = vector.broadcast %180 : f32 to vector<16x128xf32>
    %185 = arith.mulf %0, %184 : vector<16x128xf32>
    %186 = vector.broadcast %181 : f32 to vector<16x128xf32>
    %187 = arith.mulf %1, %186 : vector<16x128xf32>
    %188 = arith.addf %185, %187 : vector<16x128xf32>
    %189 = vector.broadcast %182 : f32 to vector<16x128xf32>
    %190 = arith.addf %188, %189 : vector<16x128xf32>
    %cst_75 = arith.constant 0.000000e+00 : f32
    %191 = vector.broadcast %cst_75 : f32 to vector<16x128xf32>
    %192 = arith.maximumf %190, %191 : vector<16x128xf32>
    %193 = vector.broadcast %183 : f32 to vector<16x128xf32>
    %194 = arith.mulf %192, %193 : vector<16x128xf32>
    %195 = arith.addf %179, %194 : vector<16x128xf32>
    %c0_76 = arith.constant 0 : index
    %c12 = arith.constant 12 : index
    %196 = memref.load %arg3[%c0_76, %c12] : memref<2x32xf32, #tpu.memory_space<smem>>
    %c1_77 = arith.constant 1 : index
    %c12_78 = arith.constant 12 : index
    %197 = memref.load %arg3[%c1_77, %c12_78] : memref<2x32xf32, #tpu.memory_space<smem>>
    %c12_79 = arith.constant 12 : index
    %198 = memref.load %arg4[%c12_79] : memref<32xf32, #tpu.memory_space<smem>>
    %c12_80 = arith.constant 12 : index
    %199 = memref.load %arg5[%c12_80] : memref<32xf32, #tpu.memory_space<smem>>
    %200 = vector.broadcast %196 : f32 to vector<16x128xf32>
    %201 = arith.mulf %0, %200 : vector<16x128xf32>
    %202 = vector.broadcast %197 : f32 to vector<16x128xf32>
    %203 = arith.mulf %1, %202 : vector<16x128xf32>
    %204 = arith.addf %201, %203 : vector<16x128xf32>
    %205 = vector.broadcast %198 : f32 to vector<16x128xf32>
    %206 = arith.addf %204, %205 : vector<16x128xf32>
    %cst_81 = arith.constant 0.000000e+00 : f32
    %207 = vector.broadcast %cst_81 : f32 to vector<16x128xf32>
    %208 = arith.maximumf %206, %207 : vector<16x128xf32>
    %209 = vector.broadcast %199 : f32 to vector<16x128xf32>
    %210 = arith.mulf %208, %209 : vector<16x128xf32>
    %211 = arith.addf %195, %210 : vector<16x128xf32>
    %c0_82 = arith.constant 0 : index
    %c13 = arith.constant 13 : index
    %212 = memref.load %arg3[%c0_82, %c13] : memref<2x32xf32, #tpu.memory_space<smem>>
    %c1_83 = arith.constant 1 : index
    %c13_84 = arith.constant 13 : index
    %213 = memref.load %arg3[%c1_83, %c13_84] : memref<2x32xf32, #tpu.memory_space<smem>>
    %c13_85 = arith.constant 13 : index
    %214 = memref.load %arg4[%c13_85] : memref<32xf32, #tpu.memory_space<smem>>
    %c13_86 = arith.constant 13 : index
    %215 = memref.load %arg5[%c13_86] : memref<32xf32, #tpu.memory_space<smem>>
    %216 = vector.broadcast %212 : f32 to vector<16x128xf32>
    %217 = arith.mulf %0, %216 : vector<16x128xf32>
    %218 = vector.broadcast %213 : f32 to vector<16x128xf32>
    %219 = arith.mulf %1, %218 : vector<16x128xf32>
    %220 = arith.addf %217, %219 : vector<16x128xf32>
    %221 = vector.broadcast %214 : f32 to vector<16x128xf32>
    %222 = arith.addf %220, %221 : vector<16x128xf32>
    %cst_87 = arith.constant 0.000000e+00 : f32
    %223 = vector.broadcast %cst_87 : f32 to vector<16x128xf32>
    %224 = arith.maximumf %222, %223 : vector<16x128xf32>
    %225 = vector.broadcast %215 : f32 to vector<16x128xf32>
    %226 = arith.mulf %224, %225 : vector<16x128xf32>
    %227 = arith.addf %211, %226 : vector<16x128xf32>
    %c0_88 = arith.constant 0 : index
    %c14 = arith.constant 14 : index
    %228 = memref.load %arg3[%c0_88, %c14] : memref<2x32xf32, #tpu.memory_space<smem>>
    %c1_89 = arith.constant 1 : index
    %c14_90 = arith.constant 14 : index
    %229 = memref.load %arg3[%c1_89, %c14_90] : memref<2x32xf32, #tpu.memory_space<smem>>
    %c14_91 = arith.constant 14 : index
    %230 = memref.load %arg4[%c14_91] : memref<32xf32, #tpu.memory_space<smem>>
    %c14_92 = arith.constant 14 : index
    %231 = memref.load %arg5[%c14_92] : memref<32xf32, #tpu.memory_space<smem>>
    %232 = vector.broadcast %228 : f32 to vector<16x128xf32>
    %233 = arith.mulf %0, %232 : vector<16x128xf32>
    %234 = vector.broadcast %229 : f32 to vector<16x128xf32>
    %235 = arith.mulf %1, %234 : vector<16x128xf32>
    %236 = arith.addf %233, %235 : vector<16x128xf32>
    %237 = vector.broadcast %230 : f32 to vector<16x128xf32>
    %238 = arith.addf %236, %237 : vector<16x128xf32>
    %cst_93 = arith.constant 0.000000e+00 : f32
    %239 = vector.broadcast %cst_93 : f32 to vector<16x128xf32>
    %240 = arith.maximumf %238, %239 : vector<16x128xf32>
    %241 = vector.broadcast %231 : f32 to vector<16x128xf32>
    %242 = arith.mulf %240, %241 : vector<16x128xf32>
    %243 = arith.addf %227, %242 : vector<16x128xf32>
    %c0_94 = arith.constant 0 : index
    %c15 = arith.constant 15 : index
    %244 = memref.load %arg3[%c0_94, %c15] : memref<2x32xf32, #tpu.memory_space<smem>>
    %c1_95 = arith.constant 1 : index
    %c15_96 = arith.constant 15 : index
    %245 = memref.load %arg3[%c1_95, %c15_96] : memref<2x32xf32, #tpu.memory_space<smem>>
    %c15_97 = arith.constant 15 : index
    %246 = memref.load %arg4[%c15_97] : memref<32xf32, #tpu.memory_space<smem>>
    %c15_98 = arith.constant 15 : index
    %247 = memref.load %arg5[%c15_98] : memref<32xf32, #tpu.memory_space<smem>>
    %248 = vector.broadcast %244 : f32 to vector<16x128xf32>
    %249 = arith.mulf %0, %248 : vector<16x128xf32>
    %250 = vector.broadcast %245 : f32 to vector<16x128xf32>
    %251 = arith.mulf %1, %250 : vector<16x128xf32>
    %252 = arith.addf %249, %251 : vector<16x128xf32>
    %253 = vector.broadcast %246 : f32 to vector<16x128xf32>
    %254 = arith.addf %252, %253 : vector<16x128xf32>
    %cst_99 = arith.constant 0.000000e+00 : f32
    %255 = vector.broadcast %cst_99 : f32 to vector<16x128xf32>
    %256 = arith.maximumf %254, %255 : vector<16x128xf32>
    %257 = vector.broadcast %247 : f32 to vector<16x128xf32>
    %258 = arith.mulf %256, %257 : vector<16x128xf32>
    %259 = arith.addf %243, %258 : vector<16x128xf32>
    %c0_100 = arith.constant 0 : index
    %c16 = arith.constant 16 : index
    %260 = memref.load %arg3[%c0_100, %c16] : memref<2x32xf32, #tpu.memory_space<smem>>
    %c1_101 = arith.constant 1 : index
    %c16_102 = arith.constant 16 : index
    %261 = memref.load %arg3[%c1_101, %c16_102] : memref<2x32xf32, #tpu.memory_space<smem>>
    %c16_103 = arith.constant 16 : index
    %262 = memref.load %arg4[%c16_103] : memref<32xf32, #tpu.memory_space<smem>>
    %c16_104 = arith.constant 16 : index
    %263 = memref.load %arg5[%c16_104] : memref<32xf32, #tpu.memory_space<smem>>
    %264 = vector.broadcast %260 : f32 to vector<16x128xf32>
    %265 = arith.mulf %0, %264 : vector<16x128xf32>
    %266 = vector.broadcast %261 : f32 to vector<16x128xf32>
    %267 = arith.mulf %1, %266 : vector<16x128xf32>
    %268 = arith.addf %265, %267 : vector<16x128xf32>
    %269 = vector.broadcast %262 : f32 to vector<16x128xf32>
    %270 = arith.addf %268, %269 : vector<16x128xf32>
    %cst_105 = arith.constant 0.000000e+00 : f32
    %271 = vector.broadcast %cst_105 : f32 to vector<16x128xf32>
    %272 = arith.maximumf %270, %271 : vector<16x128xf32>
    %273 = vector.broadcast %263 : f32 to vector<16x128xf32>
    %274 = arith.mulf %272, %273 : vector<16x128xf32>
    %275 = arith.addf %259, %274 : vector<16x128xf32>
    %c0_106 = arith.constant 0 : index
    %c17 = arith.constant 17 : index
    %276 = memref.load %arg3[%c0_106, %c17] : memref<2x32xf32, #tpu.memory_space<smem>>
    %c1_107 = arith.constant 1 : index
    %c17_108 = arith.constant 17 : index
    %277 = memref.load %arg3[%c1_107, %c17_108] : memref<2x32xf32, #tpu.memory_space<smem>>
    %c17_109 = arith.constant 17 : index
    %278 = memref.load %arg4[%c17_109] : memref<32xf32, #tpu.memory_space<smem>>
    %c17_110 = arith.constant 17 : index
    %279 = memref.load %arg5[%c17_110] : memref<32xf32, #tpu.memory_space<smem>>
    %280 = vector.broadcast %276 : f32 to vector<16x128xf32>
    %281 = arith.mulf %0, %280 : vector<16x128xf32>
    %282 = vector.broadcast %277 : f32 to vector<16x128xf32>
    %283 = arith.mulf %1, %282 : vector<16x128xf32>
    %284 = arith.addf %281, %283 : vector<16x128xf32>
    %285 = vector.broadcast %278 : f32 to vector<16x128xf32>
    %286 = arith.addf %284, %285 : vector<16x128xf32>
    %cst_111 = arith.constant 0.000000e+00 : f32
    %287 = vector.broadcast %cst_111 : f32 to vector<16x128xf32>
    %288 = arith.maximumf %286, %287 : vector<16x128xf32>
    %289 = vector.broadcast %279 : f32 to vector<16x128xf32>
    %290 = arith.mulf %288, %289 : vector<16x128xf32>
    %291 = arith.addf %275, %290 : vector<16x128xf32>
    %c0_112 = arith.constant 0 : index
    %c18 = arith.constant 18 : index
    %292 = memref.load %arg3[%c0_112, %c18] : memref<2x32xf32, #tpu.memory_space<smem>>
    %c1_113 = arith.constant 1 : index
    %c18_114 = arith.constant 18 : index
    %293 = memref.load %arg3[%c1_113, %c18_114] : memref<2x32xf32, #tpu.memory_space<smem>>
    %c18_115 = arith.constant 18 : index
    %294 = memref.load %arg4[%c18_115] : memref<32xf32, #tpu.memory_space<smem>>
    %c18_116 = arith.constant 18 : index
    %295 = memref.load %arg5[%c18_116] : memref<32xf32, #tpu.memory_space<smem>>
    %296 = vector.broadcast %292 : f32 to vector<16x128xf32>
    %297 = arith.mulf %0, %296 : vector<16x128xf32>
    %298 = vector.broadcast %293 : f32 to vector<16x128xf32>
    %299 = arith.mulf %1, %298 : vector<16x128xf32>
    %300 = arith.addf %297, %299 : vector<16x128xf32>
    %301 = vector.broadcast %294 : f32 to vector<16x128xf32>
    %302 = arith.addf %300, %301 : vector<16x128xf32>
    %cst_117 = arith.constant 0.000000e+00 : f32
    %303 = vector.broadcast %cst_117 : f32 to vector<16x128xf32>
    %304 = arith.maximumf %302, %303 : vector<16x128xf32>
    %305 = vector.broadcast %295 : f32 to vector<16x128xf32>
    %306 = arith.mulf %304, %305 : vector<16x128xf32>
    %307 = arith.addf %291, %306 : vector<16x128xf32>
    %c0_118 = arith.constant 0 : index
    %c19 = arith.constant 19 : index
    %308 = memref.load %arg3[%c0_118, %c19] : memref<2x32xf32, #tpu.memory_space<smem>>
    %c1_119 = arith.constant 1 : index
    %c19_120 = arith.constant 19 : index
    %309 = memref.load %arg3[%c1_119, %c19_120] : memref<2x32xf32, #tpu.memory_space<smem>>
    %c19_121 = arith.constant 19 : index
    %310 = memref.load %arg4[%c19_121] : memref<32xf32, #tpu.memory_space<smem>>
    %c19_122 = arith.constant 19 : index
    %311 = memref.load %arg5[%c19_122] : memref<32xf32, #tpu.memory_space<smem>>
    %312 = vector.broadcast %308 : f32 to vector<16x128xf32>
    %313 = arith.mulf %0, %312 : vector<16x128xf32>
    %314 = vector.broadcast %309 : f32 to vector<16x128xf32>
    %315 = arith.mulf %1, %314 : vector<16x128xf32>
    %316 = arith.addf %313, %315 : vector<16x128xf32>
    %317 = vector.broadcast %310 : f32 to vector<16x128xf32>
    %318 = arith.addf %316, %317 : vector<16x128xf32>
    %cst_123 = arith.constant 0.000000e+00 : f32
    %319 = vector.broadcast %cst_123 : f32 to vector<16x128xf32>
    %320 = arith.maximumf %318, %319 : vector<16x128xf32>
    %321 = vector.broadcast %311 : f32 to vector<16x128xf32>
    %322 = arith.mulf %320, %321 : vector<16x128xf32>
    %323 = arith.addf %307, %322 : vector<16x128xf32>
    %c0_124 = arith.constant 0 : index
    %c20 = arith.constant 20 : index
    %324 = memref.load %arg3[%c0_124, %c20] : memref<2x32xf32, #tpu.memory_space<smem>>
    %c1_125 = arith.constant 1 : index
    %c20_126 = arith.constant 20 : index
    %325 = memref.load %arg3[%c1_125, %c20_126] : memref<2x32xf32, #tpu.memory_space<smem>>
    %c20_127 = arith.constant 20 : index
    %326 = memref.load %arg4[%c20_127] : memref<32xf32, #tpu.memory_space<smem>>
    %c20_128 = arith.constant 20 : index
    %327 = memref.load %arg5[%c20_128] : memref<32xf32, #tpu.memory_space<smem>>
    %328 = vector.broadcast %324 : f32 to vector<16x128xf32>
    %329 = arith.mulf %0, %328 : vector<16x128xf32>
    %330 = vector.broadcast %325 : f32 to vector<16x128xf32>
    %331 = arith.mulf %1, %330 : vector<16x128xf32>
    %332 = arith.addf %329, %331 : vector<16x128xf32>
    %333 = vector.broadcast %326 : f32 to vector<16x128xf32>
    %334 = arith.addf %332, %333 : vector<16x128xf32>
    %cst_129 = arith.constant 0.000000e+00 : f32
    %335 = vector.broadcast %cst_129 : f32 to vector<16x128xf32>
    %336 = arith.maximumf %334, %335 : vector<16x128xf32>
    %337 = vector.broadcast %327 : f32 to vector<16x128xf32>
    %338 = arith.mulf %336, %337 : vector<16x128xf32>
    %339 = arith.addf %323, %338 : vector<16x128xf32>
    %c0_130 = arith.constant 0 : index
    %c21 = arith.constant 21 : index
    %340 = memref.load %arg3[%c0_130, %c21] : memref<2x32xf32, #tpu.memory_space<smem>>
    %c1_131 = arith.constant 1 : index
    %c21_132 = arith.constant 21 : index
    %341 = memref.load %arg3[%c1_131, %c21_132] : memref<2x32xf32, #tpu.memory_space<smem>>
    %c21_133 = arith.constant 21 : index
    %342 = memref.load %arg4[%c21_133] : memref<32xf32, #tpu.memory_space<smem>>
    %c21_134 = arith.constant 21 : index
    %343 = memref.load %arg5[%c21_134] : memref<32xf32, #tpu.memory_space<smem>>
    %344 = vector.broadcast %340 : f32 to vector<16x128xf32>
    %345 = arith.mulf %0, %344 : vector<16x128xf32>
    %346 = vector.broadcast %341 : f32 to vector<16x128xf32>
    %347 = arith.mulf %1, %346 : vector<16x128xf32>
    %348 = arith.addf %345, %347 : vector<16x128xf32>
    %349 = vector.broadcast %342 : f32 to vector<16x128xf32>
    %350 = arith.addf %348, %349 : vector<16x128xf32>
    %cst_135 = arith.constant 0.000000e+00 : f32
    %351 = vector.broadcast %cst_135 : f32 to vector<16x128xf32>
    %352 = arith.maximumf %350, %351 : vector<16x128xf32>
    %353 = vector.broadcast %343 : f32 to vector<16x128xf32>
    %354 = arith.mulf %352, %353 : vector<16x128xf32>
    %355 = arith.addf %339, %354 : vector<16x128xf32>
    %c0_136 = arith.constant 0 : index
    %c22 = arith.constant 22 : index
    %356 = memref.load %arg3[%c0_136, %c22] : memref<2x32xf32, #tpu.memory_space<smem>>
    %c1_137 = arith.constant 1 : index
    %c22_138 = arith.constant 22 : index
    %357 = memref.load %arg3[%c1_137, %c22_138] : memref<2x32xf32, #tpu.memory_space<smem>>
    %c22_139 = arith.constant 22 : index
    %358 = memref.load %arg4[%c22_139] : memref<32xf32, #tpu.memory_space<smem>>
    %c22_140 = arith.constant 22 : index
    %359 = memref.load %arg5[%c22_140] : memref<32xf32, #tpu.memory_space<smem>>
    %360 = vector.broadcast %356 : f32 to vector<16x128xf32>
    %361 = arith.mulf %0, %360 : vector<16x128xf32>
    %362 = vector.broadcast %357 : f32 to vector<16x128xf32>
    %363 = arith.mulf %1, %362 : vector<16x128xf32>
    %364 = arith.addf %361, %363 : vector<16x128xf32>
    %365 = vector.broadcast %358 : f32 to vector<16x128xf32>
    %366 = arith.addf %364, %365 : vector<16x128xf32>
    %cst_141 = arith.constant 0.000000e+00 : f32
    %367 = vector.broadcast %cst_141 : f32 to vector<16x128xf32>
    %368 = arith.maximumf %366, %367 : vector<16x128xf32>
    %369 = vector.broadcast %359 : f32 to vector<16x128xf32>
    %370 = arith.mulf %368, %369 : vector<16x128xf32>
    %371 = arith.addf %355, %370 : vector<16x128xf32>
    %c0_142 = arith.constant 0 : index
    %c23 = arith.constant 23 : index
    %372 = memref.load %arg3[%c0_142, %c23] : memref<2x32xf32, #tpu.memory_space<smem>>
    %c1_143 = arith.constant 1 : index
    %c23_144 = arith.constant 23 : index
    %373 = memref.load %arg3[%c1_143, %c23_144] : memref<2x32xf32, #tpu.memory_space<smem>>
    %c23_145 = arith.constant 23 : index
    %374 = memref.load %arg4[%c23_145] : memref<32xf32, #tpu.memory_space<smem>>
    %c23_146 = arith.constant 23 : index
    %375 = memref.load %arg5[%c23_146] : memref<32xf32, #tpu.memory_space<smem>>
    %376 = vector.broadcast %372 : f32 to vector<16x128xf32>
    %377 = arith.mulf %0, %376 : vector<16x128xf32>
    %378 = vector.broadcast %373 : f32 to vector<16x128xf32>
    %379 = arith.mulf %1, %378 : vector<16x128xf32>
    %380 = arith.addf %377, %379 : vector<16x128xf32>
    %381 = vector.broadcast %374 : f32 to vector<16x128xf32>
    %382 = arith.addf %380, %381 : vector<16x128xf32>
    %cst_147 = arith.constant 0.000000e+00 : f32
    %383 = vector.broadcast %cst_147 : f32 to vector<16x128xf32>
    %384 = arith.maximumf %382, %383 : vector<16x128xf32>
    %385 = vector.broadcast %375 : f32 to vector<16x128xf32>
    %386 = arith.mulf %384, %385 : vector<16x128xf32>
    %387 = arith.addf %371, %386 : vector<16x128xf32>
    %c0_148 = arith.constant 0 : index
    %c24 = arith.constant 24 : index
    %388 = memref.load %arg3[%c0_148, %c24] : memref<2x32xf32, #tpu.memory_space<smem>>
    %c1_149 = arith.constant 1 : index
    %c24_150 = arith.constant 24 : index
    %389 = memref.load %arg3[%c1_149, %c24_150] : memref<2x32xf32, #tpu.memory_space<smem>>
    %c24_151 = arith.constant 24 : index
    %390 = memref.load %arg4[%c24_151] : memref<32xf32, #tpu.memory_space<smem>>
    %c24_152 = arith.constant 24 : index
    %391 = memref.load %arg5[%c24_152] : memref<32xf32, #tpu.memory_space<smem>>
    %392 = vector.broadcast %388 : f32 to vector<16x128xf32>
    %393 = arith.mulf %0, %392 : vector<16x128xf32>
    %394 = vector.broadcast %389 : f32 to vector<16x128xf32>
    %395 = arith.mulf %1, %394 : vector<16x128xf32>
    %396 = arith.addf %393, %395 : vector<16x128xf32>
    %397 = vector.broadcast %390 : f32 to vector<16x128xf32>
    %398 = arith.addf %396, %397 : vector<16x128xf32>
    %cst_153 = arith.constant 0.000000e+00 : f32
    %399 = vector.broadcast %cst_153 : f32 to vector<16x128xf32>
    %400 = arith.maximumf %398, %399 : vector<16x128xf32>
    %401 = vector.broadcast %391 : f32 to vector<16x128xf32>
    %402 = arith.mulf %400, %401 : vector<16x128xf32>
    %403 = arith.addf %387, %402 : vector<16x128xf32>
    %c0_154 = arith.constant 0 : index
    %c25 = arith.constant 25 : index
    %404 = memref.load %arg3[%c0_154, %c25] : memref<2x32xf32, #tpu.memory_space<smem>>
    %c1_155 = arith.constant 1 : index
    %c25_156 = arith.constant 25 : index
    %405 = memref.load %arg3[%c1_155, %c25_156] : memref<2x32xf32, #tpu.memory_space<smem>>
    %c25_157 = arith.constant 25 : index
    %406 = memref.load %arg4[%c25_157] : memref<32xf32, #tpu.memory_space<smem>>
    %c25_158 = arith.constant 25 : index
    %407 = memref.load %arg5[%c25_158] : memref<32xf32, #tpu.memory_space<smem>>
    %408 = vector.broadcast %404 : f32 to vector<16x128xf32>
    %409 = arith.mulf %0, %408 : vector<16x128xf32>
    %410 = vector.broadcast %405 : f32 to vector<16x128xf32>
    %411 = arith.mulf %1, %410 : vector<16x128xf32>
    %412 = arith.addf %409, %411 : vector<16x128xf32>
    %413 = vector.broadcast %406 : f32 to vector<16x128xf32>
    %414 = arith.addf %412, %413 : vector<16x128xf32>
    %cst_159 = arith.constant 0.000000e+00 : f32
    %415 = vector.broadcast %cst_159 : f32 to vector<16x128xf32>
    %416 = arith.maximumf %414, %415 : vector<16x128xf32>
    %417 = vector.broadcast %407 : f32 to vector<16x128xf32>
    %418 = arith.mulf %416, %417 : vector<16x128xf32>
    %419 = arith.addf %403, %418 : vector<16x128xf32>
    %c0_160 = arith.constant 0 : index
    %c26 = arith.constant 26 : index
    %420 = memref.load %arg3[%c0_160, %c26] : memref<2x32xf32, #tpu.memory_space<smem>>
    %c1_161 = arith.constant 1 : index
    %c26_162 = arith.constant 26 : index
    %421 = memref.load %arg3[%c1_161, %c26_162] : memref<2x32xf32, #tpu.memory_space<smem>>
    %c26_163 = arith.constant 26 : index
    %422 = memref.load %arg4[%c26_163] : memref<32xf32, #tpu.memory_space<smem>>
    %c26_164 = arith.constant 26 : index
    %423 = memref.load %arg5[%c26_164] : memref<32xf32, #tpu.memory_space<smem>>
    %424 = vector.broadcast %420 : f32 to vector<16x128xf32>
    %425 = arith.mulf %0, %424 : vector<16x128xf32>
    %426 = vector.broadcast %421 : f32 to vector<16x128xf32>
    %427 = arith.mulf %1, %426 : vector<16x128xf32>
    %428 = arith.addf %425, %427 : vector<16x128xf32>
    %429 = vector.broadcast %422 : f32 to vector<16x128xf32>
    %430 = arith.addf %428, %429 : vector<16x128xf32>
    %cst_165 = arith.constant 0.000000e+00 : f32
    %431 = vector.broadcast %cst_165 : f32 to vector<16x128xf32>
    %432 = arith.maximumf %430, %431 : vector<16x128xf32>
    %433 = vector.broadcast %423 : f32 to vector<16x128xf32>
    %434 = arith.mulf %432, %433 : vector<16x128xf32>
    %435 = arith.addf %419, %434 : vector<16x128xf32>
    %c0_166 = arith.constant 0 : index
    %c27 = arith.constant 27 : index
    %436 = memref.load %arg3[%c0_166, %c27] : memref<2x32xf32, #tpu.memory_space<smem>>
    %c1_167 = arith.constant 1 : index
    %c27_168 = arith.constant 27 : index
    %437 = memref.load %arg3[%c1_167, %c27_168] : memref<2x32xf32, #tpu.memory_space<smem>>
    %c27_169 = arith.constant 27 : index
    %438 = memref.load %arg4[%c27_169] : memref<32xf32, #tpu.memory_space<smem>>
    %c27_170 = arith.constant 27 : index
    %439 = memref.load %arg5[%c27_170] : memref<32xf32, #tpu.memory_space<smem>>
    %440 = vector.broadcast %436 : f32 to vector<16x128xf32>
    %441 = arith.mulf %0, %440 : vector<16x128xf32>
    %442 = vector.broadcast %437 : f32 to vector<16x128xf32>
    %443 = arith.mulf %1, %442 : vector<16x128xf32>
    %444 = arith.addf %441, %443 : vector<16x128xf32>
    %445 = vector.broadcast %438 : f32 to vector<16x128xf32>
    %446 = arith.addf %444, %445 : vector<16x128xf32>
    %cst_171 = arith.constant 0.000000e+00 : f32
    %447 = vector.broadcast %cst_171 : f32 to vector<16x128xf32>
    %448 = arith.maximumf %446, %447 : vector<16x128xf32>
    %449 = vector.broadcast %439 : f32 to vector<16x128xf32>
    %450 = arith.mulf %448, %449 : vector<16x128xf32>
    %451 = arith.addf %435, %450 : vector<16x128xf32>
    %c0_172 = arith.constant 0 : index
    %c28 = arith.constant 28 : index
    %452 = memref.load %arg3[%c0_172, %c28] : memref<2x32xf32, #tpu.memory_space<smem>>
    %c1_173 = arith.constant 1 : index
    %c28_174 = arith.constant 28 : index
    %453 = memref.load %arg3[%c1_173, %c28_174] : memref<2x32xf32, #tpu.memory_space<smem>>
    %c28_175 = arith.constant 28 : index
    %454 = memref.load %arg4[%c28_175] : memref<32xf32, #tpu.memory_space<smem>>
    %c28_176 = arith.constant 28 : index
    %455 = memref.load %arg5[%c28_176] : memref<32xf32, #tpu.memory_space<smem>>
    %456 = vector.broadcast %452 : f32 to vector<16x128xf32>
    %457 = arith.mulf %0, %456 : vector<16x128xf32>
    %458 = vector.broadcast %453 : f32 to vector<16x128xf32>
    %459 = arith.mulf %1, %458 : vector<16x128xf32>
    %460 = arith.addf %457, %459 : vector<16x128xf32>
    %461 = vector.broadcast %454 : f32 to vector<16x128xf32>
    %462 = arith.addf %460, %461 : vector<16x128xf32>
    %cst_177 = arith.constant 0.000000e+00 : f32
    %463 = vector.broadcast %cst_177 : f32 to vector<16x128xf32>
    %464 = arith.maximumf %462, %463 : vector<16x128xf32>
    %465 = vector.broadcast %455 : f32 to vector<16x128xf32>
    %466 = arith.mulf %464, %465 : vector<16x128xf32>
    %467 = arith.addf %451, %466 : vector<16x128xf32>
    %c0_178 = arith.constant 0 : index
    %c29 = arith.constant 29 : index
    %468 = memref.load %arg3[%c0_178, %c29] : memref<2x32xf32, #tpu.memory_space<smem>>
    %c1_179 = arith.constant 1 : index
    %c29_180 = arith.constant 29 : index
    %469 = memref.load %arg3[%c1_179, %c29_180] : memref<2x32xf32, #tpu.memory_space<smem>>
    %c29_181 = arith.constant 29 : index
    %470 = memref.load %arg4[%c29_181] : memref<32xf32, #tpu.memory_space<smem>>
    %c29_182 = arith.constant 29 : index
    %471 = memref.load %arg5[%c29_182] : memref<32xf32, #tpu.memory_space<smem>>
    %472 = vector.broadcast %468 : f32 to vector<16x128xf32>
    %473 = arith.mulf %0, %472 : vector<16x128xf32>
    %474 = vector.broadcast %469 : f32 to vector<16x128xf32>
    %475 = arith.mulf %1, %474 : vector<16x128xf32>
    %476 = arith.addf %473, %475 : vector<16x128xf32>
    %477 = vector.broadcast %470 : f32 to vector<16x128xf32>
    %478 = arith.addf %476, %477 : vector<16x128xf32>
    %cst_183 = arith.constant 0.000000e+00 : f32
    %479 = vector.broadcast %cst_183 : f32 to vector<16x128xf32>
    %480 = arith.maximumf %478, %479 : vector<16x128xf32>
    %481 = vector.broadcast %471 : f32 to vector<16x128xf32>
    %482 = arith.mulf %480, %481 : vector<16x128xf32>
    %483 = arith.addf %467, %482 : vector<16x128xf32>
    %c0_184 = arith.constant 0 : index
    %c30 = arith.constant 30 : index
    %484 = memref.load %arg3[%c0_184, %c30] : memref<2x32xf32, #tpu.memory_space<smem>>
    %c1_185 = arith.constant 1 : index
    %c30_186 = arith.constant 30 : index
    %485 = memref.load %arg3[%c1_185, %c30_186] : memref<2x32xf32, #tpu.memory_space<smem>>
    %c30_187 = arith.constant 30 : index
    %486 = memref.load %arg4[%c30_187] : memref<32xf32, #tpu.memory_space<smem>>
    %c30_188 = arith.constant 30 : index
    %487 = memref.load %arg5[%c30_188] : memref<32xf32, #tpu.memory_space<smem>>
    %488 = vector.broadcast %484 : f32 to vector<16x128xf32>
    %489 = arith.mulf %0, %488 : vector<16x128xf32>
    %490 = vector.broadcast %485 : f32 to vector<16x128xf32>
    %491 = arith.mulf %1, %490 : vector<16x128xf32>
    %492 = arith.addf %489, %491 : vector<16x128xf32>
    %493 = vector.broadcast %486 : f32 to vector<16x128xf32>
    %494 = arith.addf %492, %493 : vector<16x128xf32>
    %cst_189 = arith.constant 0.000000e+00 : f32
    %495 = vector.broadcast %cst_189 : f32 to vector<16x128xf32>
    %496 = arith.maximumf %494, %495 : vector<16x128xf32>
    %497 = vector.broadcast %487 : f32 to vector<16x128xf32>
    %498 = arith.mulf %496, %497 : vector<16x128xf32>
    %499 = arith.addf %483, %498 : vector<16x128xf32>
    %c0_190 = arith.constant 0 : index
    %c31 = arith.constant 31 : index
    %500 = memref.load %arg3[%c0_190, %c31] : memref<2x32xf32, #tpu.memory_space<smem>>
    %c1_191 = arith.constant 1 : index
    %c31_192 = arith.constant 31 : index
    %501 = memref.load %arg3[%c1_191, %c31_192] : memref<2x32xf32, #tpu.memory_space<smem>>
    %c31_193 = arith.constant 31 : index
    %502 = memref.load %arg4[%c31_193] : memref<32xf32, #tpu.memory_space<smem>>
    %c31_194 = arith.constant 31 : index
    %503 = memref.load %arg5[%c31_194] : memref<32xf32, #tpu.memory_space<smem>>
    %504 = vector.broadcast %500 : f32 to vector<16x128xf32>
    %505 = arith.mulf %0, %504 : vector<16x128xf32>
    %506 = vector.broadcast %501 : f32 to vector<16x128xf32>
    %507 = arith.mulf %1, %506 : vector<16x128xf32>
    %508 = arith.addf %505, %507 : vector<16x128xf32>
    %509 = vector.broadcast %502 : f32 to vector<16x128xf32>
    %510 = arith.addf %508, %509 : vector<16x128xf32>
    %cst_195 = arith.constant 0.000000e+00 : f32
    %511 = vector.broadcast %cst_195 : f32 to vector<16x128xf32>
    %512 = arith.maximumf %510, %511 : vector<16x128xf32>
    %513 = vector.broadcast %503 : f32 to vector<16x128xf32>
    %514 = arith.mulf %512, %513 : vector<16x128xf32>
    %515 = arith.addf %499, %514 : vector<16x128xf32>
    %516 = arith.negf %515 : vector<16x128xf32>
    %517 = math.exp %516 : vector<16x128xf32>
    %cst_196 = arith.constant 1.000000e+00 : f32
    %518 = vector.broadcast %cst_196 : f32 to vector<16x128xf32>
    %519 = arith.addf %518, %517 : vector<16x128xf32>
    %520 = arith.divf %518, %519 : vector<16x128xf32>
    %c0_197 = arith.constant 0 : index
    %c0_198 = arith.constant 0 : index
    %521 = vector.load %arg7[%c0_197, %c0_198] : memref<16x128xf32, #tpu.memory_space<vmem>>, vector<16x128xf32>
    tpu.vector_store %arg7[%c0_197, %c0_198], %520 {strides = array<i32>} : memref<16x128xf32, #tpu.memory_space<vmem>>, vector<16x128xf32>,
    return
  }
  func.func @transform_0(%arg0: i32) -> (i32, i32) {
    %c0_i32 = arith.constant 0 : i32
    %c0_i32_0 = arith.constant 0 : i32
    return %arg0, %c0_i32 : i32, i32
  }
  func.func @transform_1(%arg0: i32) -> (i32, i32) {
    %c0_i32 = arith.constant 0 : i32
    %c0_i32_0 = arith.constant 0 : i32
    return %arg0, %c0_i32 : i32, i32
  }
  func.func @transform_2(%arg0: i32) -> (i32, i32) {
    %c0_i32 = arith.constant 0 : i32
    %c0_i32_0 = arith.constant 0 : i32
    %c0_i32_1 = arith.constant 0 : i32
    return %c0_i32, %c0_i32_0 : i32, i32
  }
  func.func @transform_3(%arg0: i32) -> i32 {
    %c0_i32 = arith.constant 0 : i32
    %c0_i32_0 = arith.constant 0 : i32
    return %c0_i32 : i32
  }
  func.func @transform_4(%arg0: i32) -> i32 {
    %c0_i32 = arith.constant 0 : i32
    %c0_i32_0 = arith.constant 0 : i32
    return %c0_i32 : i32
  }
  func.func @transform_5(%arg0: i32) -> i32 {
    %c0_i32 = arith.constant 0 : i32
    %c0_i32_0 = arith.constant 0 : i32
    return %c0_i32 : i32
  }
  func.func @transform_6(%arg0: i32) -> (i32, i32) {
    %c0_i32 = arith.constant 0 : i32
    %c0_i32_0 = arith.constant 0 : i32
    return %arg0, %c0_i32 : i32, i32
  }
}

</mosaic_0001>

<llo_original>
// kernel: zpredictor_forward.1
$region0: #{zpredictor_forward.1}
  #allocation0 [shape = 'u32[]', space=smem, size = 0x4, offset = 0x4, fixed_abs, tag = 'smem constant byte address 0x4 - core index']
  #allocation1 [shape = 'u32[144,128]{1,0:T(1,128)}', space=vmem, size = 0x12000, scoped, tag = 'internal scratch']
  #allocation2 [shape = 'f32[1]{0:T(128)S(6)}', space=smem, size = 0x200, scoped, tag = 'scoped memory for zpredictor_forward.1']
  %s0 = inlined_call_operand.vmem [shape: f32[16,128], index: 0, kind: input, shape index: {}]
  %s1 = inlined_call_operand.vmem [shape: f32[16,128], index: 1, kind: input, shape index: {}]
  %s2 = inlined_call_operand.vmem [shape: f32[2,32], index: 2, kind: input, shape index: {}]
  %s3 = inlined_call_operand.vmem [shape: f32[32], index: 3, kind: input, shape index: {}]
  %s4 = inlined_call_operand.vmem [shape: f32[32], index: 4, kind: input, shape index: {}]
  %s5 = inlined_call_operand.<no memory space> [shape: f32[1], index: 5, kind: input, shape index: {}]
  %s6 = inlined_call_operand.vmem [shape: f32[16,128], index: 6, kind: output, shape index: {}]
  %s7 = sld [smem:[#allocation0]]
  $region46: #{zpredictor_forward.1} parent=0
    _
  %s9 = ssub.s32 1, %s7
  %s10 = scalar_select 0, %s9, %s7
  %11 = sst [smem:[#allocation2]] %s5
  $region1: #{zpredictor_forward.1} parent=0
    #allocation3 [shape = 'u8[1024]{0}', space=smem, size = 0x400, scoped, tag = 'input window, operand 2, single buffered']
    #allocation4 [shape = 's32[1]{0}', space=sflag, size = 0x4, scoped, tag = 'scoped memory for zpredictor_forward.1']
    #allocation5 [shape = 'u8[512]{0}', space=smem, size = 0x200, scoped, tag = 'input window, operand 3, single buffered']
    #allocation6 [shape = 's32[1]{0}', space=sflag, size = 0x4, scoped, tag = 'scoped memory for zpredictor_forward.1']
    #allocation7 [shape = 'u8[512]{0}', space=smem, size = 0x200, scoped, tag = 'input window, operand 4, single buffered']
    %12 = vsyncpa [#allocation4], 0
    %13 = vsyncpa [#allocation6], 0
    // Predicated region
    $region2: #{zpredictor_forward.1} parent=1 // pred_check
      _
    $region3: #{zpredictor_forward.1} parent=1 // pred_check_branch
      %15 = sbr.rel (0) target = $region5
    $region4: #{zpredictor_forward.1} parent=1 // pred_region
      _
    $region5: #{zpredictor_forward.1} parent=1 // pred_fallthru
      _
    // Predicated region
    $region6: #{zpredictor_forward.1} parent=1 // pred_check
      _
    $region7: #{zpredictor_forward.1} parent=1 // pred_check_branch
      %17 = sbr.rel (0) target = $region9
    $region8: #{zpredictor_forward.1} parent=1 // pred_region
      _
    $region9: #{zpredictor_forward.1} parent=1 // pred_fallthru
      _
    // Predicated region
    $region10: #{zpredictor_forward.1} parent=1 // pred_check
      _
    $region11: #{zpredictor_forward.1} parent=1 // pred_check_branch
      %19 = sbr.rel (0) target = $region13
    $region12: #{zpredictor_forward.1} parent=1 // pred_region
      %s21 = ssub.s32 32, 32
      %22 = vsyncadd [#allocation4], %s21
      %s24 = sshll.u32 %s2, 4
      %s25 = int_to_ptr.vmem [resolvable:$true] %s24
      %27 = dma.vmem_to_smem %s25, 32, [#allocation3], [#allocation4]
    $region13: #{zpredictor_forward.1} parent=1 // pred_fallthru
      _
    // Predicated region
    $region14: #{zpredictor_forward.1} parent=1 // pred_check
      _
    $region15: #{zpredictor_forward.1} parent=1 // pred_check_branch
      %29 = sbr.rel (0) target = $region17
    $region16: #{zpredictor_forward.1} parent=1 // pred_region
      %s31 = ssub.s32 16, 16
      %32 = vsyncadd [#allocation6], %s31
      %s34 = sshll.u32 %s3, 4
      %s35 = int_to_ptr.vmem [resolvable:$true] %s34
      %37 = dma.vmem_to_smem %s35, 16, [#allocation5], [#allocation6]
    $region17: #{zpredictor_forward.1} parent=1 // pred_fallthru
      _
    // Predicated region
    $region18: #{zpredictor_forward.1} parent=1 // pred_check
      _
    $region19: #{zpredictor_forward.1} parent=1 // pred_check_branch
      %39 = sbr.rel (0) target = $region21
    $region20: #{zpredictor_forward.1} parent=1 // pred_region
      %s41 = ssub.s32 16, 16
      %42 = vsyncadd [#allocation6], %s41
      %s44 = sshll.u32 %s4, 4
      %s45 = int_to_ptr.vmem [resolvable:$true] %s44
      %47 = dma.vmem_to_smem %s45, 16, [#allocation7], [#allocation6]
    $region21: #{zpredictor_forward.1} parent=1 // pred_fallthru
      _
    // Predicated region
    $region22: #{zpredictor_forward.1} parent=1 // pred_check
      _
    $region23: #{zpredictor_forward.1} parent=1 // pred_check_branch
      %49 = sbr.rel (0) target = $region25
    $region24: #{zpredictor_forward.1} parent=1 // pred_region
      _
    $region25: #{zpredictor_forward.1} parent=1 // pred_fallthru
      _
    // Predicated region
    $region26: #{zpredictor_forward.1} parent=1 // pred_check
      _
    $region27: #{zpredictor_forward.1} parent=1 // pred_check_branch
      %51 = sbr.rel (0) target = $region29
    $region28: #{zpredictor_forward.1} parent=1 // pred_region
      %52 = dma.done [#allocation4], 32
    $region29: #{zpredictor_forward.1} parent=1 // pred_fallthru
      _
    // Predicated region
    $region30: #{zpredictor_forward.1} parent=1 // pred_check
      _
    $region31: #{zpredictor_forward.1} parent=1 // pred_check_branch
      %54 = sbr.rel (0) target = $region33
    $region32: #{zpredictor_forward.1} parent=1 // pred_region
      %55 = dma.done [#allocation6], 16
    $region33: #{zpredictor_forward.1} parent=1 // pred_fallthru
      _
    // Predicated region
    $region34: #{zpredictor_forward.1} parent=1 // pred_check
      _
    $region35: #{zpredictor_forward.1} parent=1 // pred_check_branch
      %57 = sbr.rel (0) target = $region37
    $region36: #{zpredictor_forward.1} parent=1 // pred_region
      %58 = dma.done [#allocation6], 16
    $region37: #{zpredictor_forward.1} parent=1 // pred_fallthru
      _
    %59 = sfence
    %v60 = vld [vmem:[%s0] sm:$0xff]
    %v61 = vld [vmem:[%s0 + $0x8] sm:$0xff]
    %v62 = vld [vmem:[%s1] sm:$0xff]
    %v63 = vld [vmem:[%s1 + $0x8] sm:$0xff]
    %s64 = sld [smem:[#allocation3]]
    %s65 = sld [smem:[#allocation3 + $0x80]]
    %s66 = sld [smem:[#allocation5]]
    %s67 = sld [smem:[#allocation7]]
    %v68 = vstv %s64
    %v69 = vmul.f32 %v60, %v68
    %v70 = vmul.f32 %v61, %v68
    %v71 = vstv %s65
    %v72 = vmul.f32 %v62, %v71
    %v73 = vmul.f32 %v63, %v71
    %v74 = vadd.f32 %v69, %v72
    %v75 = vadd.f32 %v70, %v73
    %v76 = vstv %s66
    %v77 = vadd.f32 %v74, %v76
    %v78 = vadd.f32 %v75, %v76
    %v79 = vmax.f32 %v77, 0.0
    %v80 = vmax.f32 %v78, 0.0
    %v81 = vstv %s67
    %v82 = vmul.f32 %v79, %v81
    %v83 = vmul.f32 %v80, %v81
    %s84 = sld [smem:[#allocation2]]
    %v85 = vstv %s84
    %v86 = vadd.f32 %v82, %v85
    %v87 = vadd.f32 %v83, %v85
    %s88 = sld [smem:[#allocation3 + $0x1]]
    %s89 = sld [smem:[#allocation3 + $0x81]]
    %s90 = sld [smem:[#allocation5 + $0x1]]
    %s91 = sld [smem:[#allocation7 + $0x1]]
    %v92 = vstv %s88
    %v93 = vmul.f32 %v60, %v92
    %v94 = vmul.f32 %v61, %v92
    %v95 = vstv %s89
    %v96 = vmul.f32 %v62, %v95
    %v97 = vmul.f32 %v63, %v95
    %v98 = vadd.f32 %v93, %v96
    %v99 = vadd.f32 %v94, %v97
    %v100 = vstv %s90
    %v101 = vadd.f32 %v98, %v100
    %v102 = vadd.f32 %v99, %v100
    %v103 = vmax.f32 %v101, 0.0
    %v104 = vmax.f32 %v102, 0.0
    %v105 = vstv %s91
    %v106 = vmul.f32 %v103, %v105
    %v107 = vmul.f32 %v104, %v105
    %v108 = vadd.f32 %v86, %v106
    %v109 = vadd.f32 %v87, %v107
    %s110 = sld [smem:[#allocation3 + $0x2]]
    %s111 = sld [smem:[#allocation3 + $0x82]]
    %s112 = sld [smem:[#allocation5 + $0x2]]
    %s113 = sld [smem:[#allocation7 + $0x2]]
    %v114 = vstv %s110
    %v115 = vmul.f32 %v60, %v114
    %v116 = vmul.f32 %v61, %v114
    %v117 = vstv %s111
    %v118 = vmul.f32 %v62, %v117
    %v119 = vmul.f32 %v63, %v117
    %v120 = vadd.f32 %v115, %v118
    %v121 = vadd.f32 %v116, %v119
    %v122 = vstv %s112
    %v123 = vadd.f32 %v120, %v122
    %v124 = vadd.f32 %v121, %v122
    %v125 = vmax.f32 %v123, 0.0
    %v126 = vmax.f32 %v124, 0.0
    %v127 = vstv %s113
    %v128 = vmul.f32 %v125, %v127
    %v129 = vmul.f32 %v126, %v127
    %v130 = vadd.f32 %v108, %v128
    %v131 = vadd.f32 %v109, %v129
    %s132 = sld [smem:[#allocation3 + $0x3]]
    %s133 = sld [smem:[#allocation3 + $0x83]]
    %s134 = sld [smem:[#allocation5 + $0x3]]
    %s135 = sld [smem:[#allocation7 + $0x3]]
    %v136 = vstv %s132
    %v137 = vmul.f32 %v60, %v136
    %v138 = vmul.f32 %v61, %v136
    %v139 = vstv %s133
    %v140 = vmul.f32 %v62, %v139
    %v141 = vmul.f32 %v63, %v139
    %v142 = vadd.f32 %v137, %v140
    %v143 = vadd.f32 %v138, %v141
    %v144 = vstv %s134
    %v145 = vadd.f32 %v142, %v144
    %v146 = vadd.f32 %v143, %v144
    %v147 = vmax.f32 %v145, 0.0
    %v148 = vmax.f32 %v146, 0.0
    %v149 = vstv %s135
    %v150 = vmul.f32 %v147, %v149
    %v151 = vmul.f32 %v148, %v149
    %v152 = vadd.f32 %v130, %v150
    %v153 = vadd.f32 %v131, %v151
    %s154 = sld [smem:[#allocation3 + $0x4]]
    %s155 = sld [smem:[#allocation3 + $0x84]]
    %s156 = sld [smem:[#allocation5 + $0x4]]
    %s157 = sld [smem:[#allocation7 + $0x4]]
    %v158 = vstv %s154
    %v159 = vmul.f32 %v60, %v158
    %v160 = vmul.f32 %v61, %v158
    %v161 = vstv %s155
    %v162 = vmul.f32 %v62, %v161
    %v163 = vmul.f32 %v63, %v161
    %v164 = vadd.f32 %v159, %v162
    %v165 = vadd.f32 %v160, %v163
    %v166 = vstv %s156
    %v167 = vadd.f32 %v164, %v166
    %v168 = vadd.f32 %v165, %v166
    %v169 = vmax.f32 %v167, 0.0
    %v170 = vmax.f32 %v168, 0.0
    %v171 = vstv %s157
    %v172 = vmul.f32 %v169, %v171
    %v173 = vmul.f32 %v170, %v171
    %v174 = vadd.f32 %v152, %v172
    %v175 = vadd.f32 %v153, %v173
    %s176 = sld [smem:[#allocation3 + $0x5]]
    %s177 = sld [smem:[#allocation3 + $0x85]]
    %s178 = sld [smem:[#allocation5 + $0x5]]
    %s179 = sld [smem:[#allocation7 + $0x5]]
    %v180 = vstv %s176
    %v181 = vmul.f32 %v60, %v180
    %v182 = vmul.f32 %v61, %v180
    %v183 = vstv %s177
    %v184 = vmul.f32 %v62, %v183
    %v185 = vmul.f32 %v63, %v183
    %v186 = vadd.f32 %v181, %v184
    %v187 = vadd.f32 %v182, %v185
    %v188 = vstv %s178
    %v189 = vadd.f32 %v186, %v188
    %v190 = vadd.f32 %v187, %v188
    %v191 = vmax.f32 %v189, 0.0
    %v192 = vmax.f32 %v190, 0.0
    %v193 = vstv %s179
    %v194 = vmul.f32 %v191, %v193
    %v195 = vmul.f32 %v192, %v193
    %v196 = vadd.f32 %v174, %v194
    %v197 = vadd.f32 %v175, %v195
    %s198 = sld [smem:[#allocation3 + $0x6]]
    %s199 = sld [smem:[#allocation3 + $0x86]]
    %s200 = sld [smem:[#allocation5 + $0x6]]
    %s201 = sld [smem:[#allocation7 + $0x6]]
    %v202 = vstv %s198
    %v203 = vmul.f32 %v60, %v202
    %v204 = vmul.f32 %v61, %v202
    %v205 = vstv %s199
    %v206 = vmul.f32 %v62, %v205
    %v207 = vmul.f32 %v63, %v205
    %v208 = vadd.f32 %v203, %v206
    %v209 = vadd.f32 %v204, %v207
    %v210 = vstv %s200
    %v211 = vadd.f32 %v208, %v210
    %v212 = vadd.f32 %v209, %v210
    %v213 = vmax.f32 %v211, 0.0
    %v214 = vmax.f32 %v212, 0.0
    %v215 = vstv %s201
    %v216 = vmul.f32 %v213, %v215
    %v217 = vmul.f32 %v214, %v215
    %v218 = vadd.f32 %v196, %v216
    %v219 = vadd.f32 %v197, %v217
    %s220 = sld [smem:[#allocation3 + $0x7]]
    %s221 = sld [smem:[#allocation3 + $0x87]]
    %s222 = sld [smem:[#allocation5 + $0x7]]
    %s223 = sld [smem:[#allocation7 + $0x7]]
    %v224 = vstv %s220
    %v225 = vmul.f32 %v60, %v224
    %v226 = vmul.f32 %v61, %v224
    %v227 = vstv %s221
    %v228 = vmul.f32 %v62, %v227
    %v229 = vmul.f32 %v63, %v227
    %v230 = vadd.f32 %v225, %v228
    %v231 = vadd.f32 %v226, %v229
    %v232 = vstv %s222
    %v233 = vadd.f32 %v230, %v232
    %v234 = vadd.f32 %v231, %v232
    %v235 = vmax.f32 %v233, 0.0
    %v236 = vmax.f32 %v234, 0.0
    %v237 = vstv %s223
    %v238 = vmul.f32 %v235, %v237
    %v239 = vmul.f32 %v236, %v237
    %v240 = vadd.f32 %v218, %v238
    %v241 = vadd.f32 %v219, %v239
    %s242 = sld [smem:[#allocation3 + $0x8]]
    %s243 = sld [smem:[#allocation3 + $0x88]]
    %s244 = sld [smem:[#allocation5 + $0x8]]
    %s245 = sld [smem:[#allocation7 + $0x8]]
    %v246 = vstv %s242
    %v247 = vmul.f32 %v60, %v246
    %v248 = vmul.f32 %v61, %v246
    %v249 = vstv %s243
    %v250 = vmul.f32 %v62, %v249
    %v251 = vmul.f32 %v63, %v249
    %v252 = vadd.f32 %v247, %v250
    %v253 = vadd.f32 %v248, %v251
    %v254 = vstv %s244
    %v255 = vadd.f32 %v252, %v254
    %v256 = vadd.f32 %v253, %v254
    %v257 = vmax.f32 %v255, 0.0
    %v258 = vmax.f32 %v256, 0.0
    %v259 = vstv %s245
    %v260 = vmul.f32 %v257, %v259
    %v261 = vmul.f32 %v258, %v259
    %v262 = vadd.f32 %v240, %v260
    %v263 = vadd.f32 %v241, %v261
    %s264 = sld [smem:[#allocation3 + $0x9]]
    %s265 = sld [smem:[#allocation3 + $0x89]]
    %s266 = sld [smem:[#allocation5 + $0x9]]
    %s267 = sld [smem:[#allocation7 + $0x9]]
    %v268 = vstv %s264
    %v269 = vmul.f32 %v60, %v268
    %v270 = vmul.f32 %v61, %v268
    %v271 = vstv %s265
    %v272 = vmul.f32 %v62, %v271
    %v273 = vmul.f32 %v63, %v271
    %v274 = vadd.f32 %v269, %v272
    %v275 = vadd.f32 %v270, %v273
    %v276 = vstv %s266
    %v277 = vadd.f32 %v274, %v276
    %v278 = vadd.f32 %v275, %v276
    %v279 = vmax.f32 %v277, 0.0
    %v280 = vmax.f32 %v278, 0.0
    %v281 = vstv %s267
    %v282 = vmul.f32 %v279, %v281
    %v283 = vmul.f32 %v280, %v281
    %v284 = vadd.f32 %v262, %v282
    %v285 = vadd.f32 %v263, %v283
    %s286 = sld [smem:[#allocation3 + $0xa]]
    %s287 = sld [smem:[#allocation3 + $0x8a]]
    %s288 = sld [smem:[#allocation5 + $0xa]]
    %s289 = sld [smem:[#allocation7 + $0xa]]
    %v290 = vstv %s286
    %v291 = vmul.f32 %v60, %v290
    %v292 = vmul.f32 %v61, %v290
    %v293 = vstv %s287
    %v294 = vmul.f32 %v62, %v293
    %v295 = vmul.f32 %v63, %v293
    %v296 = vadd.f32 %v291, %v294
    %v297 = vadd.f32 %v292, %v295
    %v298 = vstv %s288
    %v299 = vadd.f32 %v296, %v298
    %v300 = vadd.f32 %v297, %v298
    %v301 = vmax.f32 %v299, 0.0
    %v302 = vmax.f32 %v300, 0.0
    %v303 = vstv %s289
    %v304 = vmul.f32 %v301, %v303
    %v305 = vmul.f32 %v302, %v303
    %v306 = vadd.f32 %v284, %v304
    %v307 = vadd.f32 %v285, %v305
    %s308 = sld [smem:[#allocation3 + $0xb]]
    %s309 = sld [smem:[#allocation3 + $0x8b]]
    %s310 = sld [smem:[#allocation5 + $0xb]]
    %s311 = sld [smem:[#allocation7 + $0xb]]
    %v312 = vstv %s308
    %v313 = vmul.f32 %v60, %v312
    %v314 = vmul.f32 %v61, %v312
    %v315 = vstv %s309
    %v316 = vmul.f32 %v62, %v315
    %v317 = vmul.f32 %v63, %v315
    %v318 = vadd.f32 %v313, %v316
    %v319 = vadd.f32 %v314, %v317
    %v320 = vstv %s310
    %v321 = vadd.f32 %v318, %v320
    %v322 = vadd.f32 %v319, %v320
    %v323 = vmax.f32 %v321, 0.0
    %v324 = vmax.f32 %v322, 0.0
    %v325 = vstv %s311
    %v326 = vmul.f32 %v323, %v325
    %v327 = vmul.f32 %v324, %v325
    %v328 = vadd.f32 %v306, %v326
    %v329 = vadd.f32 %v307, %v327
    %s330 = sld [smem:[#allocation3 + $0xc]]
    %s331 = sld [smem:[#allocation3 + $0x8c]]
    %s332 = sld [smem:[#allocation5 + $0xc]]
    %s333 = sld [smem:[#allocation7 + $0xc]]
    %v334 = vstv %s330
    %v335 = vmul.f32 %v60, %v334
    %v336 = vmul.f32 %v61, %v334
    %v337 = vstv %s331
    %v338 = vmul.f32 %v62, %v337
    %v339 = vmul.f32 %v63, %v337
    %v340 = vadd.f32 %v335, %v338
    %v341 = vadd.f32 %v336, %v339
    %v342 = vstv %s332
    %v343 = vadd.f32 %v340, %v342
    %v344 = vadd.f32 %v341, %v342
    %v345 = vmax.f32 %v343, 0.0
    %v346 = vmax.f32 %v344, 0.0
    %v347 = vstv %s333
    %v348 = vmul.f32 %v345, %v347
    %v349 = vmul.f32 %v346, %v347
    %v350 = vadd.f32 %v328, %v348
    %v351 = vadd.f32 %v329, %v349
    %s352 = sld [smem:[#allocation3 + $0xd]]
    %s353 = sld [smem:[#allocation3 + $0x8d]]
    %s354 = sld [smem:[#allocation5 + $0xd]]
    %s355 = sld [smem:[#allocation7 + $0xd]]
    %v356 = vstv %s352
    %v357 = vmul.f32 %v60, %v356
    %v358 = vmul.f32 %v61, %v356
    %v359 = vstv %s353
    %v360 = vmul.f32 %v62, %v359
    %v361 = vmul.f32 %v63, %v359
    %v362 = vadd.f32 %v357, %v360
    %v363 = vadd.f32 %v358, %v361
    %v364 = vstv %s354
    %v365 = vadd.f32 %v362, %v364
    %v366 = vadd.f32 %v363, %v364
    %v367 = vmax.f32 %v365, 0.0
    %v368 = vmax.f32 %v366, 0.0
    %v369 = vstv %s355
    %v370 = vmul.f32 %v367, %v369
    %v371 = vmul.f32 %v368, %v369
    %v372 = vadd.f32 %v350, %v370
    %v373 = vadd.f32 %v351, %v371
    %s374 = sld [smem:[#allocation3 + $0xe]]
    %s375 = sld [smem:[#allocation3 + $0x8e]]
    %s376 = sld [smem:[#allocation5 + $0xe]]
    %s377 = sld [smem:[#allocation7 + $0xe]]
    %v378 = vstv %s374
    %v379 = vmul.f32 %v60, %v378
    %v380 = vmul.f32 %v61, %v378
    %v381 = vstv %s375
    %v382 = vmul.f32 %v62, %v381
    %v383 = vmul.f32 %v63, %v381
    %v384 = vadd.f32 %v379, %v382
    %v385 = vadd.f32 %v380, %v383
    %v386 = vstv %s376
    %v387 = vadd.f32 %v384, %v386
    %v388 = vadd.f32 %v385, %v386
    %v389 = vmax.f32 %v387, 0.0
    %v390 = vmax.f32 %v388, 0.0
    %v391 = vstv %s377
    %v392 = vmul.f32 %v389, %v391
    %v393 = vmul.f32 %v390, %v391
    %v394 = vadd.f32 %v372, %v392
    %v395 = vadd.f32 %v373, %v393
    %s396 = sld [smem:[#allocation3 + $0xf]]
    %s397 = sld [smem:[#allocation3 + $0x8f]]
    %s398 = sld [smem:[#allocation5 + $0xf]]
    %s399 = sld [smem:[#allocation7 + $0xf]]
    %v400 = vstv %s396
    %v401 = vmul.f32 %v60, %v400
    %v402 = vmul.f32 %v61, %v400
    %v403 = vstv %s397
    %v404 = vmul.f32 %v62, %v403
    %v405 = vmul.f32 %v63, %v403
    %v406 = vadd.f32 %v401, %v404
    %v407 = vadd.f32 %v402, %v405
    %v408 = vstv %s398
    %v409 = vadd.f32 %v406, %v408
    %v410 = vadd.f32 %v407, %v408
    %v411 = vmax.f32 %v409, 0.0
    %v412 = vmax.f32 %v410, 0.0
    %v413 = vstv %s399
    %v414 = vmul.f32 %v411, %v413
    %v415 = vmul.f32 %v412, %v413
    %v416 = vadd.f32 %v394, %v414
    %v417 = vadd.f32 %v395, %v415
    %s418 = sld [smem:[#allocation3 + $0x10]]
    %s419 = sld [smem:[#allocation3 + $0x90]]
    %s420 = sld [smem:[#allocation5 + $0x10]]
    %s421 = sld [smem:[#allocation7 + $0x10]]
    %v422 = vstv %s418
    %v423 = vmul.f32 %v60, %v422
    %v424 = vmul.f32 %v61, %v422
    %v425 = vstv %s419
    %v426 = vmul.f32 %v62, %v425
    %v427 = vmul.f32 %v63, %v425
    %v428 = vadd.f32 %v423, %v426
    %v429 = vadd.f32 %v424, %v427
    %v430 = vstv %s420
    %v431 = vadd.f32 %v428, %v430
    %v432 = vadd.f32 %v429, %v430
    %v433 = vmax.f32 %v431, 0.0
    %v434 = vmax.f32 %v432, 0.0
    %v435 = vstv %s421
    %v436 = vmul.f32 %v433, %v435
    %v437 = vmul.f32 %v434, %v435
    %v438 = vadd.f32 %v416, %v436
    %v439 = vadd.f32 %v417, %v437
    %s440 = sld [smem:[#allocation3 + $0x11]]
    %s441 = sld [smem:[#allocation3 + $0x91]]
    %s442 = sld [smem:[#allocation5 + $0x11]]
    %s443 = sld [smem:[#allocation7 + $0x11]]
    %v444 = vstv %s440
    %v445 = vmul.f32 %v60, %v444
    %v446 = vmul.f32 %v61, %v444
    %v447 = vstv %s441
    %v448 = vmul.f32 %v62, %v447
    %v449 = vmul.f32 %v63, %v447
    %v450 = vadd.f32 %v445, %v448
    %v451 = vadd.f32 %v446, %v449
    %v452 = vstv %s442
    %v453 = vadd.f32 %v450, %v452
    %v454 = vadd.f32 %v451, %v452
    %v455 = vmax.f32 %v453, 0.0
    %v456 = vmax.f32 %v454, 0.0
    %v457 = vstv %s443
    %v458 = vmul.f32 %v455, %v457
    %v459 = vmul.f32 %v456, %v457
    %v460 = vadd.f32 %v438, %v458
    %v461 = vadd.f32 %v439, %v459
    %s462 = sld [smem:[#allocation3 + $0x12]]
    %s463 = sld [smem:[#allocation3 + $0x92]]
    %s464 = sld [smem:[#allocation5 + $0x12]]
    %s465 = sld [smem:[#allocation7 + $0x12]]
    %v466 = vstv %s462
    %v467 = vmul.f32 %v60, %v466
    %v468 = vmul.f32 %v61, %v466
    %v469 = vstv %s463
    %v470 = vmul.f32 %v62, %v469
    %v471 = vmul.f32 %v63, %v469
    %v472 = vadd.f32 %v467, %v470
    %v473 = vadd.f32 %v468, %v471
    %v474 = vstv %s464
    %v475 = vadd.f32 %v472, %v474
    %v476 = vadd.f32 %v473, %v474
    %v477 = vmax.f32 %v475, 0.0
    %v478 = vmax.f32 %v476, 0.0
    %v479 = vstv %s465
    %v480 = vmul.f32 %v477, %v479
    %v481 = vmul.f32 %v478, %v479
    %v482 = vadd.f32 %v460, %v480
    %v483 = vadd.f32 %v461, %v481
    %s484 = sld [smem:[#allocation3 + $0x13]]
    %s485 = sld [smem:[#allocation3 + $0x93]]
    %s486 = sld [smem:[#allocation5 + $0x13]]
    %s487 = sld [smem:[#allocation7 + $0x13]]
    %v488 = vstv %s484
    %v489 = vmul.f32 %v60, %v488
    %v490 = vmul.f32 %v61, %v488
    %v491 = vstv %s485
    %v492 = vmul.f32 %v62, %v491
    %v493 = vmul.f32 %v63, %v491
    %v494 = vadd.f32 %v489, %v492
    %v495 = vadd.f32 %v490, %v493
    %v496 = vstv %s486
    %v497 = vadd.f32 %v494, %v496
    %v498 = vadd.f32 %v495, %v496
    %v499 = vmax.f32 %v497, 0.0
    %v500 = vmax.f32 %v498, 0.0
    %v501 = vstv %s487
    %v502 = vmul.f32 %v499, %v501
    %v503 = vmul.f32 %v500, %v501
    %v504 = vadd.f32 %v482, %v502
    %v505 = vadd.f32 %v483, %v503
    %s506 = sld [smem:[#allocation3 + $0x14]]
    %s507 = sld [smem:[#allocation3 + $0x94]]
    %s508 = sld [smem:[#allocation5 + $0x14]]
    %s509 = sld [smem:[#allocation7 + $0x14]]
    %v510 = vstv %s506
    %v511 = vmul.f32 %v60, %v510
    %v512 = vmul.f32 %v61, %v510
    %v513 = vstv %s507
    %v514 = vmul.f32 %v62, %v513
    %v515 = vmul.f32 %v63, %v513
    %v516 = vadd.f32 %v511, %v514
    %v517 = vadd.f32 %v512, %v515
    %v518 = vstv %s508
    %v519 = vadd.f32 %v516, %v518
    %v520 = vadd.f32 %v517, %v518
    %v521 = vmax.f32 %v519, 0.0
    %v522 = vmax.f32 %v520, 0.0
    %v523 = vstv %s509
    %v524 = vmul.f32 %v521, %v523
    %v525 = vmul.f32 %v522, %v523
    %v526 = vadd.f32 %v504, %v524
    %v527 = vadd.f32 %v505, %v525
    %s528 = sld [smem:[#allocation3 + $0x15]]
    %s529 = sld [smem:[#allocation3 + $0x95]]
    %s530 = sld [smem:[#allocation5 + $0x15]]
    %s531 = sld [smem:[#allocation7 + $0x15]]
    %v532 = vstv %s528
    %v533 = vmul.f32 %v60, %v532
    %v534 = vmul.f32 %v61, %v532
    %v535 = vstv %s529
    %v536 = vmul.f32 %v62, %v535
    %v537 = vmul.f32 %v63, %v535
    %v538 = vadd.f32 %v533, %v536
    %v539 = vadd.f32 %v534, %v537
    %v540 = vstv %s530
    %v541 = vadd.f32 %v538, %v540
    %v542 = vadd.f32 %v539, %v540
    %v543 = vmax.f32 %v541, 0.0
    %v544 = vmax.f32 %v542, 0.0
    %v545 = vstv %s531
    %v546 = vmul.f32 %v543, %v545
    %v547 = vmul.f32 %v544, %v545
    %v548 = vadd.f32 %v526, %v546
    %v549 = vadd.f32 %v527, %v547
    %s550 = sld [smem:[#allocation3 + $0x16]]
    %s551 = sld [smem:[#allocation3 + $0x96]]
    %s552 = sld [smem:[#allocation5 + $0x16]]
    %s553 = sld [smem:[#allocation7 + $0x16]]
    %v554 = vstv %s550
    %v555 = vmul.f32 %v60, %v554
    %v556 = vmul.f32 %v61, %v554
    %v557 = vstv %s551
    %v558 = vmul.f32 %v62, %v557
    %v559 = vmul.f32 %v63, %v557
    %v560 = vadd.f32 %v555, %v558
    %v561 = vadd.f32 %v556, %v559
    %v562 = vstv %s552
    %v563 = vadd.f32 %v560, %v562
    %v564 = vadd.f32 %v561, %v562
    %v565 = vmax.f32 %v563, 0.0
    %v566 = vmax.f32 %v564, 0.0
    %v567 = vstv %s553
    %v568 = vmul.f32 %v565, %v567
    %v569 = vmul.f32 %v566, %v567
    %v570 = vadd.f32 %v548, %v568
    %v571 = vadd.f32 %v549, %v569
    %s572 = sld [smem:[#allocation3 + $0x17]]
    %s573 = sld [smem:[#allocation3 + $0x97]]
    %s574 = sld [smem:[#allocation5 + $0x17]]
    %s575 = sld [smem:[#allocation7 + $0x17]]
    %v576 = vstv %s572
    %v577 = vmul.f32 %v60, %v576
    %v578 = vmul.f32 %v61, %v576
    %v579 = vstv %s573
    %v580 = vmul.f32 %v62, %v579
    %v581 = vmul.f32 %v63, %v579
    %v582 = vadd.f32 %v577, %v580
    %v583 = vadd.f32 %v578, %v581
    %v584 = vstv %s574
    %v585 = vadd.f32 %v582, %v584
    %v586 = vadd.f32 %v583, %v584
    %v587 = vmax.f32 %v585, 0.0
    %v588 = vmax.f32 %v586, 0.0
    %v589 = vstv %s575
    %v590 = vmul.f32 %v587, %v589
    %v591 = vmul.f32 %v588, %v589
    %v592 = vadd.f32 %v570, %v590
    %v593 = vadd.f32 %v571, %v591
    %s594 = sld [smem:[#allocation3 + $0x18]]
    %s595 = sld [smem:[#allocation3 + $0x98]]
    %s596 = sld [smem:[#allocation5 + $0x18]]
    %s597 = sld [smem:[#allocation7 + $0x18]]
    %v598 = vstv %s594
    %v599 = vmul.f32 %v60, %v598
    %v600 = vmul.f32 %v61, %v598
    %v601 = vstv %s595
    %v602 = vmul.f32 %v62, %v601
    %v603 = vmul.f32 %v63, %v601
    %v604 = vadd.f32 %v599, %v602
    %v605 = vadd.f32 %v600, %v603
    %v606 = vstv %s596
    %v607 = vadd.f32 %v604, %v606
    %v608 = vadd.f32 %v605, %v606
    %v609 = vmax.f32 %v607, 0.0
    %v610 = vmax.f32 %v608, 0.0
    %v611 = vstv %s597
    %v612 = vmul.f32 %v609, %v611
    %v613 = vmul.f32 %v610, %v611
    %v614 = vadd.f32 %v592, %v612
    %v615 = vadd.f32 %v593, %v613
    %s616 = sld [smem:[#allocation3 + $0x19]]
    %s617 = sld [smem:[#allocation3 + $0x99]]
    %s618 = sld [smem:[#allocation5 + $0x19]]
    %s619 = sld [smem:[#allocation7 + $0x19]]
    %v620 = vstv %s616
    %v621 = vmul.f32 %v60, %v620
    %v622 = vmul.f32 %v61, %v620
    %v623 = vstv %s617
    %v624 = vmul.f32 %v62, %v623
    %v625 = vmul.f32 %v63, %v623
    %v626 = vadd.f32 %v621, %v624
    %v627 = vadd.f32 %v622, %v625
    %v628 = vstv %s618
    %v629 = vadd.f32 %v626, %v628
    %v630 = vadd.f32 %v627, %v628
    %v631 = vmax.f32 %v629, 0.0
    %v632 = vmax.f32 %v630, 0.0
    %v633 = vstv %s619
    %v634 = vmul.f32 %v631, %v633
    %v635 = vmul.f32 %v632, %v633
    %v636 = vadd.f32 %v614, %v634
    %v637 = vadd.f32 %v615, %v635
    %s638 = sld [smem:[#allocation3 + $0x1a]]
    %s639 = sld [smem:[#allocation3 + $0x9a]]
    %s640 = sld [smem:[#allocation5 + $0x1a]]
    %s641 = sld [smem:[#allocation7 + $0x1a]]
    %v642 = vstv %s638
    %v643 = vmul.f32 %v60, %v642
    %v644 = vmul.f32 %v61, %v642
    %v645 = vstv %s639
    %v646 = vmul.f32 %v62, %v645
    %v647 = vmul.f32 %v63, %v645
    %v648 = vadd.f32 %v643, %v646
    %v649 = vadd.f32 %v644, %v647
    %v650 = vstv %s640
    %v651 = vadd.f32 %v648, %v650
    %v652 = vadd.f32 %v649, %v650
    %v653 = vmax.f32 %v651, 0.0
    %v654 = vmax.f32 %v652, 0.0
    %v655 = vstv %s641
    %v656 = vmul.f32 %v653, %v655
    %v657 = vmul.f32 %v654, %v655
    %v658 = vadd.f32 %v636, %v656
    %v659 = vadd.f32 %v637, %v657
    %s660 = sld [smem:[#allocation3 + $0x1b]]
    %s661 = sld [smem:[#allocation3 + $0x9b]]
    %s662 = sld [smem:[#allocation5 + $0x1b]]
    %s663 = sld [smem:[#allocation7 + $0x1b]]
    %v664 = vstv %s660
    %v665 = vmul.f32 %v60, %v664
    %v666 = vmul.f32 %v61, %v664
    %v667 = vstv %s661
    %v668 = vmul.f32 %v62, %v667
    %v669 = vmul.f32 %v63, %v667
    %v670 = vadd.f32 %v665, %v668
    %v671 = vadd.f32 %v666, %v669
    %v672 = vstv %s662
    %v673 = vadd.f32 %v670, %v672
    %v674 = vadd.f32 %v671, %v672
    %v675 = vmax.f32 %v673, 0.0
    %v676 = vmax.f32 %v674, 0.0
    %v677 = vstv %s663
    %v678 = vmul.f32 %v675, %v677
    %v679 = vmul.f32 %v676, %v677
    %v680 = vadd.f32 %v658, %v678
    %v681 = vadd.f32 %v659, %v679
    %s682 = sld [smem:[#allocation3 + $0x1c]]
    %s683 = sld [smem:[#allocation3 + $0x9c]]
    %s684 = sld [smem:[#allocation5 + $0x1c]]
    %s685 = sld [smem:[#allocation7 + $0x1c]]
    %v686 = vstv %s682
    %v687 = vmul.f32 %v60, %v686
    %v688 = vmul.f32 %v61, %v686
    %v689 = vstv %s683
    %v690 = vmul.f32 %v62, %v689
    %v691 = vmul.f32 %v63, %v689
    %v692 = vadd.f32 %v687, %v690
    %v693 = vadd.f32 %v688, %v691
    %v694 = vstv %s684
    %v695 = vadd.f32 %v692, %v694
    %v696 = vadd.f32 %v693, %v694
    %v697 = vmax.f32 %v695, 0.0
    %v698 = vmax.f32 %v696, 0.0
    %v699 = vstv %s685
    %v700 = vmul.f32 %v697, %v699
    %v701 = vmul.f32 %v698, %v699
    %v702 = vadd.f32 %v680, %v700
    %v703 = vadd.f32 %v681, %v701
    %s704 = sld [smem:[#allocation3 + $0x1d]]
    %s705 = sld [smem:[#allocation3 + $0x9d]]
    %s706 = sld [smem:[#allocation5 + $0x1d]]
    %s707 = sld [smem:[#allocation7 + $0x1d]]
    %v708 = vstv %s704
    %v709 = vmul.f32 %v60, %v708
    %v710 = vmul.f32 %v61, %v708
    %v711 = vstv %s705
    %v712 = vmul.f32 %v62, %v711
    %v713 = vmul.f32 %v63, %v711
    %v714 = vadd.f32 %v709, %v712
    %v715 = vadd.f32 %v710, %v713
    %v716 = vstv %s706
    %v717 = vadd.f32 %v714, %v716
    %v718 = vadd.f32 %v715, %v716
    %v719 = vmax.f32 %v717, 0.0
    %v720 = vmax.f32 %v718, 0.0
    %v721 = vstv %s707
    %v722 = vmul.f32 %v719, %v721
    %v723 = vmul.f32 %v720, %v721
    %v724 = vadd.f32 %v702, %v722
    %v725 = vadd.f32 %v703, %v723
    %s726 = sld [smem:[#allocation3 + $0x1e]]
    %s727 = sld [smem:[#allocation3 + $0x9e]]
    %s728 = sld [smem:[#allocation5 + $0x1e]]
    %s729 = sld [smem:[#allocation7 + $0x1e]]
    %v730 = vstv %s726
    %v731 = vmul.f32 %v60, %v730
    %v732 = vmul.f32 %v61, %v730
    %v733 = vstv %s727
    %v734 = vmul.f32 %v62, %v733
    %v735 = vmul.f32 %v63, %v733
    %v736 = vadd.f32 %v731, %v734
    %v737 = vadd.f32 %v732, %v735
    %v738 = vstv %s728
    %v739 = vadd.f32 %v736, %v738
    %v740 = vadd.f32 %v737, %v738
    %v741 = vmax.f32 %v739, 0.0
    %v742 = vmax.f32 %v740, 0.0
    %v743 = vstv %s729
    %v744 = vmul.f32 %v741, %v743
    %v745 = vmul.f32 %v742, %v743
    %v746 = vadd.f32 %v724, %v744
    %v747 = vadd.f32 %v725, %v745
    %s748 = sld [smem:[#allocation3 + $0x1f]]
    %s749 = sld [smem:[#allocation3 + $0x9f]]
    %s750 = sld [smem:[#allocation5 + $0x1f]]
    %s751 = sld [smem:[#allocation7 + $0x1f]]
    %v752 = vstv %s748
    %v753 = vmul.f32 %v60, %v752
    %v754 = vmul.f32 %v61, %v752
    %v755 = vstv %s749
    %v756 = vmul.f32 %v62, %v755
    %v757 = vmul.f32 %v63, %v755
    %v758 = vadd.f32 %v753, %v756
    %v759 = vadd.f32 %v754, %v757
    %v760 = vstv %s750
    %v761 = vadd.f32 %v758, %v760
    %v762 = vadd.f32 %v759, %v760
    %v763 = vmax.f32 %v761, 0.0
    %v764 = vmax.f32 %v762, 0.0
    %v765 = vstv %s751
    %v766 = vmul.f32 %v763, %v765
    %v767 = vmul.f32 %v764, %v765
    %v768 = vadd.f32 %v746, %v766
    %v769 = vadd.f32 %v747, %v767
    %v770 = vxor.u32 %v768, 2147483648
    %v771 = vxor.u32 %v769, 2147483648
    %v772 = vmul.f32 %v770, 1.442695
    %v773 = vpow.pop %v772
    %v774 = vmul.f32 %v771, 1.442695
    %v775 = vpow.pop %v774
    %v776 = vadd.f32 %v773, 1.0
    %v777 = vadd.f32 %v775, 1.0
    %v778 = vrcp.pop %v776
    %v779 = vmul.f32 1.0, %v778
    %v780 = vrcp.pop %v777
    %v781 = vmul.f32 1.0, %v780
    %782 = vst [vmem:[%s6] sm:$0xff] %v779
    %783 = vst [vmem:[%s6 + $0x8] sm:$0xff] %v781
    // Predicated region
    $region38: #{zpredictor_forward.1} parent=1 // pred_check
      _
    $region39: #{zpredictor_forward.1} parent=1 // pred_check_branch
      %785 = sbr.rel (0) target = $region41
    $region40: #{zpredictor_forward.1} parent=1 // pred_region
      _
    $region41: #{zpredictor_forward.1} parent=1 // pred_fallthru
      _
    // Predicated region
    $region42: #{zpredictor_forward.1} parent=1 // pred_check
      _
    $region43: #{zpredictor_forward.1} parent=1 // pred_check_branch
      %787 = sbr.rel (0) target = $region45
    $region44: #{zpredictor_forward.1} parent=1 // pred_region
      _
    $region45: #{zpredictor_forward.1} parent=1 // pred_fallthru
      _
    %788 = vsyncpa [#allocation4], 1
    %789 = vsyncpa [#allocation6], 1

</llo_original>
